<compile_context>
chip_gen: v5e
topology: v5e:2x2
jax: 0.10.0
libtpu: 0.0.40
codegen_flags: <defaults>
</compile_context>

<pallas_src>
import functools
import math

import jax
import jax.numpy as jnp
from jax.experimental import pallas as pl
from jax.experimental.pallas import tpu as pltpu


def _cross_attention_kernel(xq_ref, mem_ref, mask_ref,
                            wq_ref, bq_ref, wkv_ref, bkv_ref,
                            wo_ref, bo_ref, g_ref, b_ref,
                            o_ref, *, nhead):
    Bb, Lq, E = xq_ref.shape
    Lk = mem_ref.shape[1]
    head_dim = E // nhead
    act_dtype = xq_ref.dtype            # MXU operand dtype (bf16 when inputs are bf16)

    # ---- fused projections on (Bb*Lq, E) / (Bb*Lk, E) slabs: big MXU M-dim -------------
    xq2 = xq_ref[...].reshape(Bb * Lq, E)          # leading-dim merge (tile-aligned)
    xm2 = mem_ref[...].reshape(Bb * Lk, E)
    add_mask = mask_ref[...]                       # (Bb, 1, Lk) additive f32 mask

    q = jnp.dot(xq2, wq_ref[...], preferred_element_type=jnp.float32) + bq_ref[...]
    kv = jnp.dot(xm2, wkv_ref[...], preferred_element_type=jnp.float32) + bkv_ref[...]

    # hoisted 1/sqrt(head_dim); cast MXU operands back to activation dtype
    scale = 1.0 / math.sqrt(head_dim)
    q3 = (q * scale).astype(act_dtype).reshape(Bb, Lq, E)
    k3 = kv[:, :E].astype(act_dtype).reshape(Bb, Lk, E)     # lane-aligned 128-wide slices
    v3 = kv[:, E:].astype(act_dtype).reshape(Bb, Lk, E)

    # ---- per-head attention; output projection accumulated per head (no concat) --------
    attn = jnp.zeros((Bb * Lq, E), jnp.float32)
    for h in range(nhead):                          # static, unrolled over heads
        sl = slice(h * head_dim, (h + 1) * head_dim)
        q_h, k_h, v_h = q3[..., sl], k3[..., sl], v3[..., sl]
        s = jnp.einsum('bqd,bkd->bqk', q_h, k_h,
                       preferred_element_type=jnp.float32)   # f32 scores
        s = s + add_mask                                     # key_padding_mask (f32)
        m = jnp.max(s, axis=-1, keepdims=True)
        p = jnp.exp(s - m)                                   # unnormalised probs (f32)
        l = jnp.sum(p, axis=-1, keepdims=True)
        ctx_h = jnp.einsum('bqk,bkd->bqd', p.astype(act_dtype), v_h,
                           preferred_element_type=jnp.float32)
        ctx_h = ctx_h * pl.reciprocal(l, approx=False)       # normalise after P@V
        # sublane-aligned (head_dim % 8 == 0) row slice of W_o; accumulate on the MXU
        attn = attn + jnp.dot(ctx_h.reshape(Bb * Lq, head_dim).astype(act_dtype),
                              wo_ref[h * head_dim:(h + 1) * head_dim, :],
                              preferred_element_type=jnp.float32)
    attn = attn + bo_ref[...]

    # ---- residual (+ dropout == identity in eval) + LayerNorm, all stats in f32 --------
    y = xq2.astype(jnp.float32) + attn
    mu = jnp.mean(y, axis=-1, keepdims=True)
    var = jnp.mean((y - mu) ** 2, axis=-1, keepdims=True)
    yn = (y - mu) * jax.lax.rsqrt(var + 1e-5)
    out = yn * g_ref[...] + b_ref[...]
    o_ref[...] = out.reshape(Bb, Lq, E).astype(o_ref.dtype)


def _choose_block_batch(B, Lq, target_rows=256):
    """Largest divisor Bb of B with Bb*Lq <= target_rows; keep grid >= 2 when B >= 2
    so the 'parallel' batch axis can still shard across both v7x TensorCores."""
    best = 1
    for d in range(1, B + 1):
        if B % d:
            continue
        if d * Lq > target_rows:
            continue
        if B >= 2 and B // d < 2:
            continue
        best = d
    return best


@functools.partial(jax.jit, static_argnames=("nhead",))
def cross_attention(quries, mem, masks, wq, bq, wkv, bkv, wo, bo, gamma, beta, *, nhead):
    B, Lq, E = quries.shape
    Lk = mem.shape[1]
    assert E % nhead == 0, "emb_size must be divisible by nhead"
    Bb = _choose_block_batch(B, Lq)

    # PyTorch key_padding_mask semantics: True = ignore that key -> additive float mask.
    add_mask = jnp.where(masks, -1e9, 0.0).astype(jnp.float32)[:, None, :]   # (B, 1, Lk)

    kernel = functools.partial(_cross_attention_kernel, nhead=nhead)

    return pl.pallas_call(
        kernel,
        out_shape=jax.ShapeDtypeStruct((B, Lq, E), quries.dtype),
        grid_spec=pltpu.PrefetchScalarGridSpec(
            num_scalar_prefetch=0,
            grid=(B // Bb,),
            in_specs=[
                pl.BlockSpec((Bb, Lq, E), lambda b: (b, 0, 0)),   # queries (Bb batches)
                pl.BlockSpec((Bb, Lk, E), lambda b: (b, 0, 0)),   # mem (Bb batches)
                pl.BlockSpec((Bb, 1, Lk), lambda b: (b, 0, 0)),   # additive mask
                pl.BlockSpec((E, E), lambda b: (0, 0)),           # W_q  [in, out]
                pl.BlockSpec((1, E), lambda b: (0, 0)),           # b_q
                pl.BlockSpec((E, 2 * E), lambda b: (0, 0)),       # W_kv fused [Wk | Wv]
                pl.BlockSpec((1, 2 * E), lambda b: (0, 0)),       # b_kv fused
                pl.BlockSpec((E, E), lambda b: (0, 0)),           # W_o
                pl.BlockSpec((1, E), lambda b: (0, 0)),           # b_o
                pl.BlockSpec((1, E), lambda b: (0, 0)),           # LayerNorm gamma
                pl.BlockSpec((1, E), lambda b: (0, 0)),           # LayerNorm beta
            ],
            out_specs=pl.BlockSpec((Bb, Lq, E), lambda b: (b, 0, 0)),
        ),
        compiler_params=pltpu.CompilerParams(
            dimension_semantics=("parallel",),
            vmem_limit_bytes=48 * 1024 * 1024,   # headroom for larger E/Bb; < v7x physical
        ),
    )(quries, mem, add_mask, wq, bq, wkv, bkv, wo, bo, gamma, beta)


def init_params(key, emb, dtype=jnp.float32):
    """Deterministic synthetic params matching nn.MultiheadAttention + LayerNorm shapes.

    Weights stored [in, out] (transpose of PyTorch); K and V weights pre-concatenated.
    """
    k1, k2, k3, k4, k5, k6, k7, k8, k9, k10 = jax.random.split(key, 10)
    s = 1.0 / math.sqrt(emb)
    wq = jax.random.normal(k1, (emb, emb), dtype) * s
    bq = jax.random.normal(k2, (1, emb), dtype) * 0.01
    wk = jax.random.normal(k3, (emb, emb), dtype) * s
    bk = jax.random.normal(k4, (1, emb), dtype) * 0.01
    wv = jax.random.normal(k5, (emb, emb), dtype) * s
    bv = jax.random.normal(k6, (1, emb), dtype) * 0.01
    wkv = jnp.concatenate([wk, wv], axis=1)          # (E, 2E)
    bkv = jnp.concatenate([bk, bv], axis=1)          # (1, 2E)
    wo = jax.random.normal(k7, (emb, emb), dtype) * s
    bo = jax.random.normal(k8, (1, emb), dtype) * 0.01
    gamma = 1.0 + 0.1 * jax.random.normal(k9, (1, emb), dtype)
    beta = 0.1 * jax.random.normal(k10, (1, emb), dtype)
    return wq, bq, wkv, bkv, wo, bo, gamma, beta


def reference(quries, mem, masks, wq, bq, wkv, bkv, wo, bo, gamma, beta, nhead):
    """Pure-JAX reference matching PyTorch CrossAttention.forward (eval mode)."""
    B, Lq, E = quries.shape
    Lk = mem.shape[1]
    D = E // nhead
    q = quries @ wq + bq
    kv = mem @ wkv + bkv
    k, v = kv[..., :E], kv[..., E:]
    qh = q.reshape(B, Lq, nhead, D).transpose(0, 2, 1, 3)
    kh = k.reshape(B, Lk, nhead, D).transpose(0, 2, 1, 3)
    vh = v.reshape(B, Lk, nhead, D).transpose(0, 2, 1, 3)
    s = jnp.einsum('bhqd,bhkd->bhqk', qh, kh) * (1.0 / math.sqrt(D))
    s = s + jnp.where(masks, -1e9, 0.0)[:, None, None, :]
    p = jax.nn.softmax(s, axis=-1)
    ctx = jnp.einsum('bhqk,bhkd->bhqd', p, vh).transpose(0, 2, 1, 3).reshape(B, Lq, E)
    attn = ctx @ wo + bo
    y = quries + attn                       # dropout is identity in eval mode
    mu = y.mean(-1, keepdims=True)
    var = ((y - mu) ** 2).mean(-1, keepdims=True)
    return (y - mu) * jax.lax.rsqrt(var + 1e-5) * gamma + beta


if __name__ == "__main__":
    key = jax.random.PRNGKey(0)
    # head_dim = 32; E lane-dense (128); Bb=4 folds to a 32-row MXU M-dim, grid = 2 steps
    B, Lq, Lk, E, nhead = 8, 8, 16, 128, 4

    kq, km, kp = jax.random.split(key, 3)
    quries = jax.random.normal(kq, (B, Lq, E), jnp.float32)
    mem = jax.random.normal(km, (B, Lk, E), jnp.float32)
    valid_lens = jnp.array([16, 12, 16, 8, 16, 10, 7, 13], dtype=jnp.int32)
    masks = jnp.arange(Lk)[None, :] >= valid_lens[:, None]   # True = padded key

    params = init_params(kp, E)

    # f32 path: matches the reference tightly.
    out = cross_attention(quries, mem, masks, *params, nhead=nhead)
    out = jax.block_until_ready(out)
    ref = reference(quries, mem, masks, *params, nhead)
    assert out.shape == (B, Lq, E)
    assert jnp.allclose(out, ref, atol=2e-4, rtol=2e-4), "f32 mismatch vs reference"

    # bf16 path: MXU operands in bf16, f32 accumulation + f32 softmax/LayerNorm stats.
    q_bf, m_bf = quries.astype(jnp.bfloat16), mem.astype(jnp.bfloat16)
    params_bf = tuple(p.astype(jnp.bfloat16) for p in params)
    out_bf = cross_attention(q_bf, m_bf, masks, *params_bf, nhead=nhead)
    out_bf = jax.block_until_ready(out_bf)
    ref_bf = reference(q_bf.astype(jnp.float32), m_bf.astype(jnp.float32), masks,
                       *[p.astype(jnp.float32) for p in params_bf], nhead)
    assert out_bf.shape == (B, Lq, E)
    assert jnp.allclose(out_bf.astype(jnp.float32), ref_bf, atol=1e-1, rtol=1e-1), \
        "bf16 mismatch vs reference"

    print("KERNEL_OK")
</pallas_src>

<mosaic_0001>
module attributes {stable_mosaic.version = 11 : i64} {
  func.func @_cross_attention_kernel(%arg0: i32, %arg1: memref<4x8x128xf32, #tpu.memory_space<vmem>>, %arg2: memref<4x16x128xf32, #tpu.memory_space<vmem>>, %arg3: memref<4x1x16xf32, #tpu.memory_space<vmem>>, %arg4: memref<128x128xf32, #tpu.memory_space<vmem>>, %arg5: memref<1x128xf32, #tpu.memory_space<vmem>>, %arg6: memref<128x256xf32, #tpu.memory_space<vmem>>, %arg7: memref<1x256xf32, #tpu.memory_space<vmem>>, %arg8: memref<128x128xf32, #tpu.memory_space<vmem>>, %arg9: memref<1x128xf32, #tpu.memory_space<vmem>>, %arg10: memref<1x128xf32, #tpu.memory_space<vmem>>, %arg11: memref<1x128xf32, #tpu.memory_space<vmem>>, %arg12: memref<4x8x128xf32, #tpu.memory_space<vmem>>) attributes {dimension_semantics = [#tpu.dimension_semantics<parallel>], iteration_bounds = array<i64: 2>, scalar_prefetch = 0 : i64, scratch_operands = 0 : i64, tpu.core_type = #tpu.core_type<tc>, window_params = [{transform_indices = @transform_0, window_bounds = array<i64: 4, 8, 128>}, {transform_indices = @transform_1, window_bounds = array<i64: 4, 16, 128>}, {transform_indices = @transform_2, window_bounds = array<i64: 4, 1, 16>}, {pipeline_mode = #tpu.pipeline_mode<synchronous>, transform_indices = @transform_3, window_bounds = array<i64: 128, 128>}, {pipeline_mode = #tpu.pipeline_mode<synchronous>, transform_indices = @transform_4, window_bounds = array<i64: 1, 128>}, {pipeline_mode = #tpu.pipeline_mode<synchronous>, transform_indices = @transform_5, window_bounds = array<i64: 128, 256>}, {pipeline_mode = #tpu.pipeline_mode<synchronous>, transform_indices = @transform_6, window_bounds = array<i64: 1, 256>}, {pipeline_mode = #tpu.pipeline_mode<synchronous>, transform_indices = @transform_7, window_bounds = array<i64: 128, 128>}, {pipeline_mode = #tpu.pipeline_mode<synchronous>, transform_indices = @transform_8, window_bounds = array<i64: 1, 128>}, {pipeline_mode = #tpu.pipeline_mode<synchronous>, transform_indices = @transform_9, window_bounds = array<i64: 1, 128>}, {pipeline_mode = #tpu.pipeline_mode<synchronous>, transform_indices = @transform_10, window_bounds = array<i64: 1, 128>}, {transform_indices = @transform_11, window_bounds = array<i64: 4, 8, 128>}]} {
    %c0 = arith.constant 0 : index
    %c0_0 = arith.constant 0 : index
    %c0_1 = arith.constant 0 : index
    %0 = vector.load %arg1[%c0, %c0_0, %c0_1] : memref<4x8x128xf32, #tpu.memory_space<vmem>>, vector<4x8x128xf32>
    %1 = vector.shape_cast %0 : vector<4x8x128xf32> to vector<32x128xf32>
    %c0_2 = arith.constant 0 : index
    %c0_3 = arith.constant 0 : index
    %c0_4 = arith.constant 0 : index
    %2 = vector.load %arg2[%c0_2, %c0_3, %c0_4] : memref<4x16x128xf32, #tpu.memory_space<vmem>>, vector<4x16x128xf32>
    %3 = vector.shape_cast %2 : vector<4x16x128xf32> to vector<64x128xf32>
    %c0_5 = arith.constant 0 : index
    %c0_6 = arith.constant 0 : index
    %c0_7 = arith.constant 0 : index
    %4 = vector.load %arg3[%c0_5, %c0_6, %c0_7] : memref<4x1x16xf32, #tpu.memory_space<vmem>>, vector<4x1x16xf32>
    %c0_8 = arith.constant 0 : index
    %c0_9 = arith.constant 0 : index
    %5 = vector.load %arg4[%c0_8, %c0_9] : memref<128x128xf32, #tpu.memory_space<vmem>>, vector<128x128xf32>
    %cst = arith.constant dense<0.000000e+00> : vector<32x128xf32>
    %6 = tpu.matmul %1, %5, %cst {dimension_numbers = #tpu.dot_dimension_numbers<[1], [0], [0], [1], [0, 0, 1, 1], [], []>} : vector<32x128xf32>, vector<128x128xf32>, vector<32x128xf32> -> vector<32x128xf32>
    %c0_10 = arith.constant 0 : index
    %c0_11 = arith.constant 0 : index
    %7 = vector.load %arg5[%c0_10, %c0_11] : memref<1x128xf32, #tpu.memory_space<vmem>>, vector<1x128xf32>
    %8 = vector.broadcast %7 : vector<1x128xf32> to vector<32x128xf32>
    %9 = arith.addf %6, %8 : vector<32x128xf32>
    %c0_12 = arith.constant 0 : index
    %c0_13 = arith.constant 0 : index
    %10 = vector.load %arg6[%c0_12, %c0_13] : memref<128x256xf32, #tpu.memory_space<vmem>>, vector<128x256xf32>
    %cst_14 = arith.constant dense<0.000000e+00> : vector<64x256xf32>
    %11 = tpu.matmul %3, %10, %cst_14 {dimension_numbers = #tpu.dot_dimension_numbers<[1], [0], [0], [1], [0, 0, 1, 1], [], []>} : vector<64x128xf32>, vector<128x256xf32>, vector<64x256xf32> -> vector<64x256xf32>
    %c0_15 = arith.constant 0 : index
    %c0_16 = arith.constant 0 : index
    %12 = vector.load %arg7[%c0_15, %c0_16] : memref<1x256xf32, #tpu.memory_space<vmem>>, vector<1x256xf32>
    %13 = vector.broadcast %12 : vector<1x256xf32> to vector<64x256xf32>
    %14 = arith.addf %11, %13 : vector<64x256xf32>
    %cst_17 = arith.constant 0.176776692 : f32
    %15 = vector.broadcast %cst_17 : f32 to vector<32x128xf32>
    %16 = arith.mulf %9, %15 : vector<32x128xf32>
    %17 = vector.shape_cast %16 : vector<32x128xf32> to vector<4x8x128xf32>
    %18 = vector.extract_strided_slice %14 {offsets = [0, 0], sizes = [64, 128], strides = [1, 1]} : vector<64x256xf32> to vector<64x128xf32>
    %19 = vector.shape_cast %18 : vector<64x128xf32> to vector<4x16x128xf32>
    %20 = vector.extract_strided_slice %14 {offsets = [0, 128], sizes = [64, 128], strides = [1, 1]} : vector<64x256xf32> to vector<64x128xf32>
    %21 = vector.shape_cast %20 : vector<64x128xf32> to vector<4x16x128xf32>
    %cst_18 = arith.constant 0.000000e+00 : f32
    %22 = vector.broadcast %cst_18 : f32 to vector<32x128xf32>
    %23 = vector.extract_strided_slice %17 {offsets = [0, 0, 0], sizes = [4, 8, 32], strides = [1, 1, 1]} : vector<4x8x128xf32> to vector<4x8x32xf32>
    %24 = vector.extract_strided_slice %19 {offsets = [0, 0, 0], sizes = [4, 16, 32], strides = [1, 1, 1]} : vector<4x16x128xf32> to vector<4x16x32xf32>
    %25 = vector.extract_strided_slice %21 {offsets = [0, 0, 0], sizes = [4, 16, 32], strides = [1, 1, 1]} : vector<4x16x128xf32> to vector<4x16x32xf32>
    "tpu.trace_start"() <{level = 10 : i32, message = "bqd,bkd->bqk"}> : () -> ()
    %cst_19 = arith.constant dense<0.000000e+00> : vector<4x8x16xf32>
    %26 = tpu.matmul %23, %24, %cst_19 {dimension_numbers = #tpu.dot_dimension_numbers<[2], [2], [1], [1], [0, 0, 0, 1, 1, 1], [0], [0]>} : vector<4x8x32xf32>, vector<4x16x32xf32>, vector<4x8x16xf32> -> vector<4x8x16xf32>
    "tpu.trace_stop"() : () -> ()
    %27 = vector.broadcast %4 : vector<4x1x16xf32> to vector<4x8x16xf32>
    %28 = arith.addf %26, %27 : vector<4x8x16xf32>
    %cst_20 = arith.constant dense<0xFF800000> : vector<4x8xf32>
    %29 = vector.multi_reduction <maximumf>, %28, %cst_20 [2] : vector<4x8x16xf32> to vector<4x8xf32>
    %30 = vector.shape_cast %29 : vector<4x8xf32> to vector<4x8x1xf32>
    %31 = vector.broadcast %30 : vector<4x8x1xf32> to vector<4x8x16xf32>
    %32 = arith.subf %28, %31 : vector<4x8x16xf32>
    %33 = math.exp %32 : vector<4x8x16xf32>
    %cst_21 = arith.constant dense<0.000000e+00> : vector<4x8xf32>
    %34 = vector.multi_reduction <add>, %33, %cst_21 [2] : vector<4x8x16xf32> to vector<4x8xf32>
    %35 = vector.shape_cast %34 : vector<4x8xf32> to vector<4x8x1xf32>
    "tpu.trace_start"() <{level = 10 : i32, message = "bqk,bkd->bqd"}> : () -> ()
    %cst_22 = arith.constant dense<0.000000e+00> : vector<4x8x32xf32>
    %36 = tpu.matmul %33, %25, %cst_22 {dimension_numbers = #tpu.dot_dimension_numbers<[2], [1], [1], [2], [0, 0, 0, 1, 1, 2], [0], [0]>} : vector<4x8x16xf32>, vector<4x16x32xf32>, vector<4x8x32xf32> -> vector<4x8x32xf32>
    "tpu.trace_stop"() : () -> ()
    %37 = tpu.reciprocal %35 : vector<4x8x1xf32> -> vector<4x8x1xf32>
    %38 = vector.broadcast %37 : vector<4x8x1xf32> to vector<4x8x32xf32>
    %39 = arith.mulf %36, %38 : vector<4x8x32xf32>
    %40 = vector.shape_cast %39 : vector<4x8x32xf32> to vector<32x32xf32>
    %c0_23 = arith.constant 0 : index
    %c0_24 = arith.constant 0 : index
    %41 = vector.load %arg8[%c0_23, %c0_24] : memref<128x128xf32, #tpu.memory_space<vmem>>, vector<32x128xf32>
    %cst_25 = arith.constant dense<0.000000e+00> : vector<32x128xf32>
    %42 = tpu.matmul %40, %41, %cst_25 {dimension_numbers = #tpu.dot_dimension_numbers<[1], [0], [0], [1], [0, 0, 1, 1], [], []>} : vector<32x32xf32>, vector<32x128xf32>, vector<32x128xf32> -> vector<32x128xf32>
    %43 = arith.addf %22, %42 : vector<32x128xf32>
    %44 = vector.extract_strided_slice %17 {offsets = [0, 0, 32], sizes = [4, 8, 32], strides = [1, 1, 1]} : vector<4x8x128xf32> to vector<4x8x32xf32>
    %45 = vector.extract_strided_slice %19 {offsets = [0, 0, 32], sizes = [4, 16, 32], strides = [1, 1, 1]} : vector<4x16x128xf32> to vector<4x16x32xf32>
    %46 = vector.extract_strided_slice %21 {offsets = [0, 0, 32], sizes = [4, 16, 32], strides = [1, 1, 1]} : vector<4x16x128xf32> to vector<4x16x32xf32>
    "tpu.trace_start"() <{level = 10 : i32, message = "bqd,bkd->bqk"}> : () -> ()
    %cst_26 = arith.constant dense<0.000000e+00> : vector<4x8x16xf32>
    %47 = tpu.matmul %44, %45, %cst_26 {dimension_numbers = #tpu.dot_dimension_numbers<[2], [2], [1], [1], [0, 0, 0, 1, 1, 1], [0], [0]>} : vector<4x8x32xf32>, vector<4x16x32xf32>, vector<4x8x16xf32> -> vector<4x8x16xf32>
    "tpu.trace_stop"() : () -> ()
    %48 = vector.broadcast %4 : vector<4x1x16xf32> to vector<4x8x16xf32>
    %49 = arith.addf %47, %48 : vector<4x8x16xf32>
    %cst_27 = arith.constant dense<0xFF800000> : vector<4x8xf32>
    %50 = vector.multi_reduction <maximumf>, %49, %cst_27 [2] : vector<4x8x16xf32> to vector<4x8xf32>
    %51 = vector.shape_cast %50 : vector<4x8xf32> to vector<4x8x1xf32>
    %52 = vector.broadcast %51 : vector<4x8x1xf32> to vector<4x8x16xf32>
    %53 = arith.subf %49, %52 : vector<4x8x16xf32>
    %54 = math.exp %53 : vector<4x8x16xf32>
    %cst_28 = arith.constant dense<0.000000e+00> : vector<4x8xf32>
    %55 = vector.multi_reduction <add>, %54, %cst_28 [2] : vector<4x8x16xf32> to vector<4x8xf32>
    %56 = vector.shape_cast %55 : vector<4x8xf32> to vector<4x8x1xf32>
    "tpu.trace_start"() <{level = 10 : i32, message = "bqk,bkd->bqd"}> : () -> ()
    %cst_29 = arith.constant dense<0.000000e+00> : vector<4x8x32xf32>
    %57 = tpu.matmul %54, %46, %cst_29 {dimension_numbers = #tpu.dot_dimension_numbers<[2], [1], [1], [2], [0, 0, 0, 1, 1, 2], [0], [0]>} : vector<4x8x16xf32>, vector<4x16x32xf32>, vector<4x8x32xf32> -> vector<4x8x32xf32>
    "tpu.trace_stop"() : () -> ()
    %58 = tpu.reciprocal %56 : vector<4x8x1xf32> -> vector<4x8x1xf32>
    %59 = vector.broadcast %58 : vector<4x8x1xf32> to vector<4x8x32xf32>
    %60 = arith.mulf %57, %59 : vector<4x8x32xf32>
    %61 = vector.shape_cast %60 : vector<4x8x32xf32> to vector<32x32xf32>
    %c32 = arith.constant 32 : index
    %c0_30 = arith.constant 0 : index
    %62 = vector.load %arg8[%c32, %c0_30] : memref<128x128xf32, #tpu.memory_space<vmem>>, vector<32x128xf32>
    %cst_31 = arith.constant dense<0.000000e+00> : vector<32x128xf32>
    %63 = tpu.matmul %61, %62, %cst_31 {dimension_numbers = #tpu.dot_dimension_numbers<[1], [0], [0], [1], [0, 0, 1, 1], [], []>} : vector<32x32xf32>, vector<32x128xf32>, vector<32x128xf32> -> vector<32x128xf32>
    %64 = arith.addf %43, %63 : vector<32x128xf32>
    %65 = vector.extract_strided_slice %17 {offsets = [0, 0, 64], sizes = [4, 8, 32], strides = [1, 1, 1]} : vector<4x8x128xf32> to vector<4x8x32xf32>
    %66 = vector.extract_strided_slice %19 {offsets = [0, 0, 64], sizes = [4, 16, 32], strides = [1, 1, 1]} : vector<4x16x128xf32> to vector<4x16x32xf32>
    %67 = vector.extract_strided_slice %21 {offsets = [0, 0, 64], sizes = [4, 16, 32], strides = [1, 1, 1]} : vector<4x16x128xf32> to vector<4x16x32xf32>
    "tpu.trace_start"() <{level = 10 : i32, message = "bqd,bkd->bqk"}> : () -> ()
    %cst_32 = arith.constant dense<0.000000e+00> : vector<4x8x16xf32>
    %68 = tpu.matmul %65, %66, %cst_32 {dimension_numbers = #tpu.dot_dimension_numbers<[2], [2], [1], [1], [0, 0, 0, 1, 1, 1], [0], [0]>} : vector<4x8x32xf32>, vector<4x16x32xf32>, vector<4x8x16xf32> -> vector<4x8x16xf32>
    "tpu.trace_stop"() : () -> ()
    %69 = vector.broadcast %4 : vector<4x1x16xf32> to vector<4x8x16xf32>
    %70 = arith.addf %68, %69 : vector<4x8x16xf32>
    %cst_33 = arith.constant dense<0xFF800000> : vector<4x8xf32>
    %71 = vector.multi_reduction <maximumf>, %70, %cst_33 [2] : vector<4x8x16xf32> to vector<4x8xf32>
    %72 = vector.shape_cast %71 : vector<4x8xf32> to vector<4x8x1xf32>
    %73 = vector.broadcast %72 : vector<4x8x1xf32> to vector<4x8x16xf32>
    %74 = arith.subf %70, %73 : vector<4x8x16xf32>
    %75 = math.exp %74 : vector<4x8x16xf32>
    %cst_34 = arith.constant dense<0.000000e+00> : vector<4x8xf32>
    %76 = vector.multi_reduction <add>, %75, %cst_34 [2] : vector<4x8x16xf32> to vector<4x8xf32>
    %77 = vector.shape_cast %76 : vector<4x8xf32> to vector<4x8x1xf32>
    "tpu.trace_start"() <{level = 10 : i32, message = "bqk,bkd->bqd"}> : () -> ()
    %cst_35 = arith.constant dense<0.000000e+00> : vector<4x8x32xf32>
    %78 = tpu.matmul %75, %67, %cst_35 {dimension_numbers = #tpu.dot_dimension_numbers<[2], [1], [1], [2], [0, 0, 0, 1, 1, 2], [0], [0]>} : vector<4x8x16xf32>, vector<4x16x32xf32>, vector<4x8x32xf32> -> vector<4x8x32xf32>
    "tpu.trace_stop"() : () -> ()
    %79 = tpu.reciprocal %77 : vector<4x8x1xf32> -> vector<4x8x1xf32>
    %80 = vector.broadcast %79 : vector<4x8x1xf32> to vector<4x8x32xf32>
    %81 = arith.mulf %78, %80 : vector<4x8x32xf32>
    %82 = vector.shape_cast %81 : vector<4x8x32xf32> to vector<32x32xf32>
    %c64 = arith.constant 64 : index
    %c0_36 = arith.constant 0 : index
    %83 = vector.load %arg8[%c64, %c0_36] : memref<128x128xf32, #tpu.memory_space<vmem>>, vector<32x128xf32>
    %cst_37 = arith.constant dense<0.000000e+00> : vector<32x128xf32>
    %84 = tpu.matmul %82, %83, %cst_37 {dimension_numbers = #tpu.dot_dimension_numbers<[1], [0], [0], [1], [0, 0, 1, 1], [], []>} : vector<32x32xf32>, vector<32x128xf32>, vector<32x128xf32> -> vector<32x128xf32>
    %85 = arith.addf %64, %84 : vector<32x128xf32>
    %86 = vector.extract_strided_slice %17 {offsets = [0, 0, 96], sizes = [4, 8, 32], strides = [1, 1, 1]} : vector<4x8x128xf32> to vector<4x8x32xf32>
    %87 = vector.extract_strided_slice %19 {offsets = [0, 0, 96], sizes = [4, 16, 32], strides = [1, 1, 1]} : vector<4x16x128xf32> to vector<4x16x32xf32>
    %88 = vector.extract_strided_slice %21 {offsets = [0, 0, 96], sizes = [4, 16, 32], strides = [1, 1, 1]} : vector<4x16x128xf32> to vector<4x16x32xf32>
    "tpu.trace_start"() <{level = 10 : i32, message = "bqd,bkd->bqk"}> : () -> ()
    %cst_38 = arith.constant dense<0.000000e+00> : vector<4x8x16xf32>
    %89 = tpu.matmul %86, %87, %cst_38 {dimension_numbers = #tpu.dot_dimension_numbers<[2], [2], [1], [1], [0, 0, 0, 1, 1, 1], [0], [0]>} : vector<4x8x32xf32>, vector<4x16x32xf32>, vector<4x8x16xf32> -> vector<4x8x16xf32>
    "tpu.trace_stop"() : () -> ()
    %90 = vector.broadcast %4 : vector<4x1x16xf32> to vector<4x8x16xf32>
    %91 = arith.addf %89, %90 : vector<4x8x16xf32>
    %cst_39 = arith.constant dense<0xFF800000> : vector<4x8xf32>
    %92 = vector.multi_reduction <maximumf>, %91, %cst_39 [2] : vector<4x8x16xf32> to vector<4x8xf32>
    %93 = vector.shape_cast %92 : vector<4x8xf32> to vector<4x8x1xf32>
    %94 = vector.broadcast %93 : vector<4x8x1xf32> to vector<4x8x16xf32>
    %95 = arith.subf %91, %94 : vector<4x8x16xf32>
    %96 = math.exp %95 : vector<4x8x16xf32>
    %cst_40 = arith.constant dense<0.000000e+00> : vector<4x8xf32>
    %97 = vector.multi_reduction <add>, %96, %cst_40 [2] : vector<4x8x16xf32> to vector<4x8xf32>
    %98 = vector.shape_cast %97 : vector<4x8xf32> to vector<4x8x1xf32>
    "tpu.trace_start"() <{level = 10 : i32, message = "bqk,bkd->bqd"}> : () -> ()
    %cst_41 = arith.constant dense<0.000000e+00> : vector<4x8x32xf32>
    %99 = tpu.matmul %96, %88, %cst_41 {dimension_numbers = #tpu.dot_dimension_numbers<[2], [1], [1], [2], [0, 0, 0, 1, 1, 2], [0], [0]>} : vector<4x8x16xf32>, vector<4x16x32xf32>, vector<4x8x32xf32> -> vector<4x8x32xf32>
    "tpu.trace_stop"() : () -> ()
    %100 = tpu.reciprocal %98 : vector<4x8x1xf32> -> vector<4x8x1xf32>
    %101 = vector.broadcast %100 : vector<4x8x1xf32> to vector<4x8x32xf32>
    %102 = arith.mulf %99, %101 : vector<4x8x32xf32>
    %103 = vector.shape_cast %102 : vector<4x8x32xf32> to vector<32x32xf32>
    %c96 = arith.constant 96 : index
    %c0_42 = arith.constant 0 : index
    %104 = vector.load %arg8[%c96, %c0_42] : memref<128x128xf32, #tpu.memory_space<vmem>>, vector<32x128xf32>
    %cst_43 = arith.constant dense<0.000000e+00> : vector<32x128xf32>
    %105 = tpu.matmul %103, %104, %cst_43 {dimension_numbers = #tpu.dot_dimension_numbers<[1], [0], [0], [1], [0, 0, 1, 1], [], []>} : vector<32x32xf32>, vector<32x128xf32>, vector<32x128xf32> -> vector<32x128xf32>
    %106 = arith.addf %85, %105 : vector<32x128xf32>
    %c0_44 = arith.constant 0 : index
    %c0_45 = arith.constant 0 : index
    %107 = vector.load %arg9[%c0_44, %c0_45] : memref<1x128xf32, #tpu.memory_space<vmem>>, vector<1x128xf32>
    %108 = vector.broadcast %107 : vector<1x128xf32> to vector<32x128xf32>
    %109 = arith.addf %106, %108 : vector<32x128xf32>
    %110 = arith.addf %1, %109 : vector<32x128xf32>
    %cst_46 = arith.constant dense<0.000000e+00> : vector<32xf32>
    %111 = vector.multi_reduction <add>, %110, %cst_46 [1] : vector<32x128xf32> to vector<32xf32>
    %112 = vector.shape_cast %111 : vector<32xf32> to vector<32x1xf32>
    %cst_47 = arith.constant 1.280000e+02 : f32
    %113 = vector.broadcast %cst_47 : f32 to vector<32x1xf32>
    %114 = arith.divf %112, %113 : vector<32x1xf32>
    %115 = vector.broadcast %114 : vector<32x1xf32> to vector<32x128xf32>
    %116 = arith.subf %110, %115 : vector<32x128xf32>
    %117 = arith.mulf %116, %116 : vector<32x128xf32>
    %cst_48 = arith.constant dense<0.000000e+00> : vector<32xf32>
    %118 = vector.multi_reduction <add>, %117, %cst_48 [1] : vector<32x128xf32> to vector<32xf32>
    %119 = vector.shape_cast %118 : vector<32xf32> to vector<32x1xf32>
    %cst_49 = arith.constant 1.280000e+02 : f32
    %120 = vector.broadcast %cst_49 : f32 to vector<32x1xf32>
    %121 = arith.divf %119, %120 : vector<32x1xf32>
    %122 = vector.broadcast %114 : vector<32x1xf32> to vector<32x128xf32>
    %123 = arith.subf %110, %122 : vector<32x128xf32>
    %cst_50 = arith.constant 9.99999974E-6 : f32
    %124 = vector.broadcast %cst_50 : f32 to vector<32x1xf32>
    %125 = arith.addf %121, %124 : vector<32x1xf32>
    %126 = math.rsqrt %125 : vector<32x1xf32>
    %127 = vector.broadcast %126 : vector<32x1xf32> to vector<32x128xf32>
    %128 = arith.mulf %123, %127 : vector<32x128xf32>
    %c0_51 = arith.constant 0 : index
    %c0_52 = arith.constant 0 : index
    %129 = vector.load %arg10[%c0_51, %c0_52] : memref<1x128xf32, #tpu.memory_space<vmem>>, vector<1x128xf32>
    %130 = vector.broadcast %129 : vector<1x128xf32> to vector<32x128xf32>
    %131 = arith.mulf %128, %130 : vector<32x128xf32>
    %c0_53 = arith.constant 0 : index
    %c0_54 = arith.constant 0 : index
    %132 = vector.load %arg11[%c0_53, %c0_54] : memref<1x128xf32, #tpu.memory_space<vmem>>, vector<1x128xf32>
    %133 = vector.broadcast %132 : vector<1x128xf32> to vector<32x128xf32>
    %134 = arith.addf %131, %133 : vector<32x128xf32>
    %135 = vector.shape_cast %134 : vector<32x128xf32> to vector<4x8x128xf32>
    %c0_55 = arith.constant 0 : index
    %c0_56 = arith.constant 0 : index
    %c0_57 = arith.constant 0 : index
    %136 = vector.load %arg12[%c0_55, %c0_56, %c0_57] : memref<4x8x128xf32, #tpu.memory_space<vmem>>, vector<4x8x128xf32>
    tpu.vector_store %arg12[%c0_55, %c0_56, %c0_57], %135 {strides = array<i32>} : memref<4x8x128xf32, #tpu.memory_space<vmem>>, vector<4x8x128xf32>,
    return
  }
  func.func @transform_0(%arg0: i32) -> (i32, i32, i32) {
    %c0_i32 = arith.constant 0 : i32
    %c0_i32_0 = arith.constant 0 : i32
    %c0_i32_1 = arith.constant 0 : i32
    return %arg0, %c0_i32, %c0_i32_0 : i32, i32, i32
  }
  func.func @transform_1(%arg0: i32) -> (i32, i32, i32) {
    %c0_i32 = arith.constant 0 : i32
    %c0_i32_0 = arith.constant 0 : i32
    %c0_i32_1 = arith.constant 0 : i32
    return %arg0, %c0_i32, %c0_i32_0 : i32, i32, i32
  }
  func.func @transform_2(%arg0: i32) -> (i32, i32, i32) {
    %c0_i32 = arith.constant 0 : i32
    %c0_i32_0 = arith.constant 0 : i32
    %c0_i32_1 = arith.constant 0 : i32
    return %arg0, %c0_i32, %c0_i32_0 : i32, i32, i32
  }
  func.func @transform_3(%arg0: i32) -> (i32, i32) {
    %c0_i32 = arith.constant 0 : i32
    %c0_i32_0 = arith.constant 0 : i32
    %c0_i32_1 = arith.constant 0 : i32
    return %c0_i32, %c0_i32_0 : i32, i32
  }
  func.func @transform_4(%arg0: i32) -> (i32, i32) {
    %c0_i32 = arith.constant 0 : i32
    %c0_i32_0 = arith.constant 0 : i32
    %c0_i32_1 = arith.constant 0 : i32
    return %c0_i32, %c0_i32_0 : i32, i32
  }
  func.func @transform_5(%arg0: i32) -> (i32, i32) {
    %c0_i32 = arith.constant 0 : i32
    %c0_i32_0 = arith.constant 0 : i32
    %c0_i32_1 = arith.constant 0 : i32
    return %c0_i32, %c0_i32_0 : i32, i32
  }
  func.func @transform_6(%arg0: i32) -> (i32, i32) {
    %c0_i32 = arith.constant 0 : i32
    %c0_i32_0 = arith.constant 0 : i32
    %c0_i32_1 = arith.constant 0 : i32
    return %c0_i32, %c0_i32_0 : i32, i32
  }
  func.func @transform_7(%arg0: i32) -> (i32, i32) {
    %c0_i32 = arith.constant 0 : i32
    %c0_i32_0 = arith.constant 0 : i32
    %c0_i32_1 = arith.constant 0 : i32
    return %c0_i32, %c0_i32_0 : i32, i32
  }
  func.func @transform_8(%arg0: i32) -> (i32, i32) {
    %c0_i32 = arith.constant 0 : i32
    %c0_i32_0 = arith.constant 0 : i32
    %c0_i32_1 = arith.constant 0 : i32
    return %c0_i32, %c0_i32_0 : i32, i32
  }
  func.func @transform_9(%arg0: i32) -> (i32, i32) {
    %c0_i32 = arith.constant 0 : i32
    %c0_i32_0 = arith.constant 0 : i32
    %c0_i32_1 = arith.constant 0 : i32
    return %c0_i32, %c0_i32_0 : i32, i32
  }
  func.func @transform_10(%arg0: i32) -> (i32, i32) {
    %c0_i32 = arith.constant 0 : i32
    %c0_i32_0 = arith.constant 0 : i32
    %c0_i32_1 = arith.constant 0 : i32
    return %c0_i32, %c0_i32_0 : i32, i32
  }
  func.func @transform_11(%arg0: i32) -> (i32, i32, i32) {
    %c0_i32 = arith.constant 0 : i32
    %c0_i32_0 = arith.constant 0 : i32
    %c0_i32_1 = arith.constant 0 : i32
    return %arg0, %c0_i32, %c0_i32_0 : i32, i32, i32
  }
}

</mosaic_0001>

<llo_original>
// kernel: cross_attention.1
$region0: #{cross_attention.1}
  #allocation0 [shape = 'u32[]', space=smem, size = 0x4, offset = 0x4, fixed_abs, tag = 'smem constant byte address 0x4 - core index']
  #allocation1 [shape = 'u32[72,128]{1,0:T(1,128)}', space=vmem, size = 0x9000, scoped, tag = 'internal scratch']
  %s0 = inlined_call_operand.hbm [shape: f32[8,8,128], index: 0, kind: input, shape index: {}]
  %s1 = inlined_call_operand.hbm [shape: f32[8,16,128], index: 1, kind: input, shape index: {}]
  %s2 = inlined_call_operand.vmem [shape: f32[8,1,16], index: 2, kind: input, shape index: {}]
  %s3 = inlined_call_operand.hbm [shape: f32[128,128], index: 3, kind: input, shape index: {}]
  %s4 = inlined_call_operand.vmem [shape: f32[1,128], index: 4, kind: input, shape index: {}]
  %s5 = inlined_call_operand.hbm [shape: f32[128,256], index: 5, kind: input, shape index: {}]
  %s6 = inlined_call_operand.vmem [shape: f32[1,256], index: 6, kind: input, shape index: {}]
  %s7 = inlined_call_operand.hbm [shape: f32[128,128], index: 7, kind: input, shape index: {}]
  %s8 = inlined_call_operand.vmem [shape: f32[1,128], index: 8, kind: input, shape index: {}]
  %s9 = inlined_call_operand.vmem [shape: f32[1,128], index: 9, kind: input, shape index: {}]
  %s10 = inlined_call_operand.vmem [shape: f32[1,128], index: 10, kind: input, shape index: {}]
  %s11 = inlined_call_operand.hbm [shape: f32[8,8,128], index: 11, kind: output, shape index: {}]
  %s12 = sld [smem:[#allocation0]]
  $region97: #{cross_attention.1} parent=0
    _
  %s14 = ssub.s32 1, %s12
  %s15 = scalar_select 0, %s14, %s12
  $region1: #{cross_attention.1} parent=0
    #allocation2 [shape = 'u8[32768]{0}', space=vmem, size = 0x8000, scoped, tag = 'input window, operand 0']
    #allocation3 [shape = 's32[2]{0}', space=sflag, size = 0x8, scoped, tag = 'scoped memory for cross_attention.1']
    #allocation4 [shape = 's32[2]{0}', space=sflag, size = 0x8, scoped, tag = 'scoped memory for cross_attention.1']
    #allocation5 [shape = 'u8[65536]{0}', space=vmem, size = 0x10000, scoped, tag = 'input window, operand 1']
    #allocation6 [shape = 's32[2]{0}', space=sflag, size = 0x8, scoped, tag = 'scoped memory for cross_attention.1']
    #allocation7 [shape = 'u8[65536]{0}', space=vmem, size = 0x10000, scoped, tag = 'input window, operand 3, single buffered']
    #allocation8 [shape = 'u8[131072]{0}', space=vmem, size = 0x20000, scoped, tag = 'input window, operand 5, single buffered']
    #allocation9 [shape = 's32[1]{0}', space=sflag, size = 0x4, scoped, tag = 'scoped memory for cross_attention.1']
    #allocation10 [shape = 'u8[65536]{0}', space=vmem, size = 0x10000, scoped, tag = 'input window, operand 7, single buffered']
    #allocation11 [shape = 'u8[32768]{0}', space=vmem, size = 0x8000, scoped, tag = 'output window, operand 0']
    %16 = vsyncpa [#allocation3], 0
    %s17 = scalar_lea.sflag [#allocation3], 1
    %18 = vsyncpa %s17, 0
    %19 = vsyncpa [#allocation6], 0
    %s20 = scalar_lea.sflag [#allocation6], 1
    %21 = vsyncpa %s20, 0
    %22 = vsyncpa [#allocation9], 0
    %23 = vsyncpa [#allocation4], 0
    %s24 = scalar_lea.sflag [#allocation4], 1
    %25 = vsyncpa %s24, 0
    loop: start=0, step=1, limit=4
    $region2: #{cross_attention.1} parent=1 // loop_pre_header
      _
    $region3: #{cross_attention.1} parent=1 // loop_header
      %s27 = sphi 0, %s31
      %p28 = scmp.ge.s32.totalorder %s27, 4
      %s37 = sphi 0, %s39
      %s40 = sphi 0, %s37
      %s41 = sphi 0, %s40
      %s57 = sphi 0, %s41
      %s63 = sphi 0, %s65
      %s66 = sphi 0, %s63
      %s67 = sphi 0, %s66
      %s83 = sphi 0, %s67
      %s89 = sphi 0, %s91
      %s92 = sphi 0, %s89
      %s93 = sphi 0, %s92
      %s109 = sphi 0, %s93
      %s113 = sphi 0, %s113
      %s115 = sphi 0, %s113
      %s116 = sphi 0, %s115
      %s130 = sphi 0, %s116
      %s134 = sphi 0, %s134
      %s136 = sphi 0, %s134
      %s137 = sphi 0, %s136
      %s151 = sphi 0, %s137
      %s155 = sphi 0, %s155
      %s157 = sphi 0, %s155
      %s158 = sphi 0, %s157
      %s172 = sphi 0, %s158
      %s176 = sphi 0, %s176
      %s178 = sphi 0, %s176
      %s179 = sphi 0, %s178
      %s193 = sphi 0, %s179
      %s197 = sphi 0, %s197
      %s199 = sphi 0, %s197
      %s200 = sphi 0, %s199
      %s214 = sphi 0, %s200
      %s218 = sphi 0, %s218
      %s220 = sphi 0, %s218
      %s221 = sphi 0, %s220
      %s235 = sphi 0, %s221
      %s239 = sphi 0, %s239
      %s241 = sphi 0, %s239
      %s242 = sphi 0, %s241
      %s256 = sphi 0, %s242
      %s260 = sphi 0, %s260
      %s262 = sphi 0, %s260
      %s263 = sphi 0, %s262
      %s277 = sphi 0, %s263
      %s283 = sphi 0, %s285
      %s286 = sphi 0, %s283
      %s287 = sphi 0, %s286
      %s303 = sphi 0, %s287
    $region4: #{cross_attention.1} parent=1 // loop_header_branch
      %30 = sbr.rel (%p28) target = $region8
    $region5: #{cross_attention.1} parent=1 // loop_body
      %s32 = ssub.s32 %s27, 1
      %s33 = ssub.s32 %s27, 2
      %s34 = sadd.s32 %s27, 1
      %s35 = ssub.s32 %s27, %s34
      %p36 = scmp.eq.s32.totalorder %s35, 0
      %s38 = sadd.s32 %s37, 1
      %s39 = scalar_select %p36, %s37, %s38
      %p42 = pneg %p36
      %p43 = scmp.eq.s32.totalorder %s27, 1
      %p44 = por %p42, %p43
      %p45 = scmp.ne.s32.totalorder %s37, %s40
      %p46 = scmp.eq.s32.totalorder %s27, 0
      %p47 = por %p45, %p46
      %p48 = scmp.ne.s32.totalorder %s37, %s40
      %p49 = scmp.eq.s32.totalorder %s32, 1
      %p50 = por %p48, %p49
      %p51 = scmp.ne.s32.totalorder %s40, %s41
      %p52 = scmp.eq.s32.totalorder %s32, 0
      %p53 = por %p51, %p52
      %p54 = scmp.ne.s32.totalorder %s40, %s41
      %p55 = scmp.eq.s32.totalorder %s33, 1
      %p56 = por %p54, %p55
      %p58 = scmp.ne.s32.totalorder %s41, %s57
      %p59 = scmp.eq.s32.totalorder %s33, 0
      %p60 = por %p58, %p59
      %s61 = ssub.s32 %s27, %s34
      %p62 = scmp.eq.s32.totalorder %s61, 0
      %s64 = sadd.s32 %s63, 1
      %s65 = scalar_select %p62, %s63, %s64
      %p68 = pneg %p62
      %p69 = scmp.eq.s32.totalorder %s27, 1
      %p70 = por %p68, %p69
      %p71 = scmp.ne.s32.totalorder %s63, %s66
      %p72 = scmp.eq.s32.totalorder %s27, 0
      %p73 = por %p71, %p72
      %p74 = scmp.ne.s32.totalorder %s63, %s66
      %p75 = scmp.eq.s32.totalorder %s32, 1
      %p76 = por %p74, %p75
      %p77 = scmp.ne.s32.totalorder %s66, %s67
      %p78 = scmp.eq.s32.totalorder %s32, 0
      %p79 = por %p77, %p78
      %p80 = scmp.ne.s32.totalorder %s66, %s67
      %p81 = scmp.eq.s32.totalorder %s33, 1
      %p82 = por %p80, %p81
      %p84 = scmp.ne.s32.totalorder %s67, %s83
      %p85 = scmp.eq.s32.totalorder %s33, 0
      %p86 = por %p84, %p85
      %s87 = ssub.s32 %s27, %s34
      %p88 = scmp.eq.s32.totalorder %s87, 0
      %s90 = sadd.s32 %s89, 1
      %s91 = scalar_select %p88, %s89, %s90
      %p94 = pneg %p88
      %p95 = scmp.eq.s32.totalorder %s27, 1
      %p96 = por %p94, %p95
      %p97 = scmp.ne.s32.totalorder %s89, %s92
      %p98 = scmp.eq.s32.totalorder %s27, 0
      %p99 = por %p97, %p98
      %p100 = scmp.ne.s32.totalorder %s89, %s92
      %p101 = scmp.eq.s32.totalorder %s32, 1
      %p102 = por %p100, %p101
      %p103 = scmp.ne.s32.totalorder %s92, %s93
      %p104 = scmp.eq.s32.totalorder %s32, 0
      %p105 = por %p103, %p104
      %p106 = scmp.ne.s32.totalorder %s92, %s93
      %p107 = scmp.eq.s32.totalorder %s33, 1
      %p108 = por %p106, %p107
      %p110 = scmp.ne.s32.totalorder %s93, %s109
      %p111 = scmp.eq.s32.totalorder %s33, 0
      %p112 = por %p110, %p111
      %s114 = sadd.s32 %s113, 1
      %p117 = scmp.eq.s32.totalorder %s27, 1
      %p118 = scmp.ne.s32.totalorder %s113, %s115
      %p119 = scmp.eq.s32.totalorder %s27, 0
      %p120 = por %p118, %p119
      %p121 = scmp.ne.s32.totalorder %s113, %s115
      %p122 = scmp.eq.s32.totalorder %s32, 1
      %p123 = por %p121, %p122
      %p124 = scmp.ne.s32.totalorder %s115, %s116
      %p125 = scmp.eq.s32.totalorder %s32, 0
      %p126 = por %p124, %p125
      %p127 = scmp.ne.s32.totalorder %s115, %s116
      %p128 = scmp.eq.s32.totalorder %s33, 1
      %p129 = por %p127, %p128
      %p131 = scmp.ne.s32.totalorder %s116, %s130
      %p132 = scmp.eq.s32.totalorder %s33, 0
      %p133 = por %p131, %p132
      %s135 = sadd.s32 %s134, 1
      %p138 = scmp.eq.s32.totalorder %s27, 1
      %p139 = scmp.ne.s32.totalorder %s134, %s136
      %p140 = scmp.eq.s32.totalorder %s27, 0
      %p141 = por %p139, %p140
      %p142 = scmp.ne.s32.totalorder %s134, %s136
      %p143 = scmp.eq.s32.totalorder %s32, 1
      %p144 = por %p142, %p143
      %p145 = scmp.ne.s32.totalorder %s136, %s137
      %p146 = scmp.eq.s32.totalorder %s32, 0
      %p147 = por %p145, %p146
      %p148 = scmp.ne.s32.totalorder %s136, %s137
      %p149 = scmp.eq.s32.totalorder %s33, 1
      %p150 = por %p148, %p149
      %p152 = scmp.ne.s32.totalorder %s137, %s151
      %p153 = scmp.eq.s32.totalorder %s33, 0
      %p154 = por %p152, %p153
      %s156 = sadd.s32 %s155, 1
      %p159 = scmp.eq.s32.totalorder %s27, 1
      %p160 = scmp.ne.s32.totalorder %s155, %s157
      %p161 = scmp.eq.s32.totalorder %s27, 0
      %p162 = por %p160, %p161
      %p163 = scmp.ne.s32.totalorder %s155, %s157
      %p164 = scmp.eq.s32.totalorder %s32, 1
      %p165 = por %p163, %p164
      %p166 = scmp.ne.s32.totalorder %s157, %s158
      %p167 = scmp.eq.s32.totalorder %s32, 0
      %p168 = por %p166, %p167
      %p169 = scmp.ne.s32.totalorder %s157, %s158
      %p170 = scmp.eq.s32.totalorder %s33, 1
      %p171 = por %p169, %p170
      %p173 = scmp.ne.s32.totalorder %s158, %s172
      %p174 = scmp.eq.s32.totalorder %s33, 0
      %p175 = por %p173, %p174
      %s177 = sadd.s32 %s176, 1
      %p180 = scmp.eq.s32.totalorder %s27, 1
      %p181 = scmp.ne.s32.totalorder %s176, %s178
      %p182 = scmp.eq.s32.totalorder %s27, 0
      %p183 = por %p181, %p182
      %p184 = scmp.ne.s32.totalorder %s176, %s178
      %p185 = scmp.eq.s32.totalorder %s32, 1
      %p186 = por %p184, %p185
      %p187 = scmp.ne.s32.totalorder %s178, %s179
      %p188 = scmp.eq.s32.totalorder %s32, 0
      %p189 = por %p187, %p188
      %p190 = scmp.ne.s32.totalorder %s178, %s179
      %p191 = scmp.eq.s32.totalorder %s33, 1
      %p192 = por %p190, %p191
      %p194 = scmp.ne.s32.totalorder %s179, %s193
      %p195 = scmp.eq.s32.totalorder %s33, 0
      %p196 = por %p194, %p195
      %s198 = sadd.s32 %s197, 1
      %p201 = scmp.eq.s32.totalorder %s27, 1
      %p202 = scmp.ne.s32.totalorder %s197, %s199
      %p203 = scmp.eq.s32.totalorder %s27, 0
      %p204 = por %p202, %p203
      %p205 = scmp.ne.s32.totalorder %s197, %s199
      %p206 = scmp.eq.s32.totalorder %s32, 1
      %p207 = por %p205, %p206
      %p208 = scmp.ne.s32.totalorder %s199, %s200
      %p209 = scmp.eq.s32.totalorder %s32, 0
      %p210 = por %p208, %p209
      %p211 = scmp.ne.s32.totalorder %s199, %s200
      %p212 = scmp.eq.s32.totalorder %s33, 1
      %p213 = por %p211, %p212
      %p215 = scmp.ne.s32.totalorder %s200, %s214
      %p216 = scmp.eq.s32.totalorder %s33, 0
      %p217 = por %p215, %p216
      %s219 = sadd.s32 %s218, 1
      %p222 = scmp.eq.s32.totalorder %s27, 1
      %p223 = scmp.ne.s32.totalorder %s218, %s220
      %p224 = scmp.eq.s32.totalorder %s27, 0
      %p225 = por %p223, %p224
      %p226 = scmp.ne.s32.totalorder %s218, %s220
      %p227 = scmp.eq.s32.totalorder %s32, 1
      %p228 = por %p226, %p227
      %p229 = scmp.ne.s32.totalorder %s220, %s221
      %p230 = scmp.eq.s32.totalorder %s32, 0
      %p231 = por %p229, %p230
      %p232 = scmp.ne.s32.totalorder %s220, %s221
      %p233 = scmp.eq.s32.totalorder %s33, 1
      %p234 = por %p232, %p233
      %p236 = scmp.ne.s32.totalorder %s221, %s235
      %p237 = scmp.eq.s32.totalorder %s33, 0
      %p238 = por %p236, %p237
      %s240 = sadd.s32 %s239, 1
      %p243 = scmp.eq.s32.totalorder %s27, 1
      %p244 = scmp.ne.s32.totalorder %s239, %s241
      %p245 = scmp.eq.s32.totalorder %s27, 0
      %p246 = por %p244, %p245
      %p247 = scmp.ne.s32.totalorder %s239, %s241
      %p248 = scmp.eq.s32.totalorder %s32, 1
      %p249 = por %p247, %p248
      %p250 = scmp.ne.s32.totalorder %s241, %s242
      %p251 = scmp.eq.s32.totalorder %s32, 0
      %p252 = por %p250, %p251
      %p253 = scmp.ne.s32.totalorder %s241, %s242
      %p254 = scmp.eq.s32.totalorder %s33, 1
      %p255 = por %p253, %p254
      %p257 = scmp.ne.s32.totalorder %s242, %s256
      %p258 = scmp.eq.s32.totalorder %s33, 0
      %p259 = por %p257, %p258
      %s261 = sadd.s32 %s260, 1
      %p264 = scmp.eq.s32.totalorder %s27, 1
      %p265 = scmp.ne.s32.totalorder %s260, %s262
      %p266 = scmp.eq.s32.totalorder %s27, 0
      %p267 = por %p265, %p266
      %p268 = scmp.ne.s32.totalorder %s260, %s262
      %p269 = scmp.eq.s32.totalorder %s32, 1
      %p270 = por %p268, %p269
      %p271 = scmp.ne.s32.totalorder %s262, %s263
      %p272 = scmp.eq.s32.totalorder %s32, 0
      %p273 = por %p271, %p272
      %p274 = scmp.ne.s32.totalorder %s262, %s263
      %p275 = scmp.eq.s32.totalorder %s33, 1
      %p276 = por %p274, %p275
      %p278 = scmp.ne.s32.totalorder %s263, %s277
      %p279 = scmp.eq.s32.totalorder %s33, 0
      %p280 = por %p278, %p279
      %s281 = ssub.s32 %s27, %s34
      %p282 = scmp.eq.s32.totalorder %s281, 0
      %s284 = sadd.s32 %s283, 1
      %s285 = scalar_select %p282, %s283, %s284
      %p288 = pneg %p282
      %p289 = scmp.eq.s32.totalorder %s27, 1
      %p290 = por %p288, %p289
      %p291 = scmp.ne.s32.totalorder %s283, %s286
      %p292 = scmp.eq.s32.totalorder %s27, 0
      %p293 = por %p291, %p292
      %p294 = scmp.ne.s32.totalorder %s283, %s286
      %p295 = scmp.eq.s32.totalorder %s32, 1
      %p296 = por %p294, %p295
      %p297 = scmp.ne.s32.totalorder %s286, %s287
      %p298 = scmp.eq.s32.totalorder %s32, 0
      %p299 = por %p297, %p298
      %p300 = scmp.ne.s32.totalorder %s286, %s287
      %p301 = scmp.eq.s32.totalorder %s33, 1
      %p302 = por %p300, %p301
      %p304 = scmp.ne.s32.totalorder %s287, %s303
      %p305 = scmp.eq.s32.totalorder %s33, 0
      %p306 = por %p304, %p305
      %p307 = scmp.le.s32.totalorder 1, %s27
      %p308 = scmp.lt.s32.totalorder %s27, 3
      %p309 = pnand %p307, %p308
      %p310 = pneg %p309
      // Predicated region
      $region9: #{cross_attention.1} parent=5 // pred_check
        _
      $region10: #{cross_attention.1} parent=5 // pred_check_branch
        %312 = sbr.rel (%p309) target = $region12
      $region11: #{cross_attention.1} parent=5 // pred_region
        %s313 = ssub.s32 %s27, 1
        // Predicated region
        $region13: #{cross_attention.1} parent=11 // pred_check
          %p314 = pneg %p126
        $region14: #{cross_attention.1} parent=11 // pred_check_branch
          %316 = sbr.rel (%p314) target = $region16
        $region15: #{cross_attention.1} parent=11 // pred_region
          %318 = vsyncadd [#allocation6], 0
          %s319 = sshll.u32 %s3, 4
          %s320 = int_to_ptr.hbm [resolvable:$true] %s319
          %s321 = sshll.u32 [#allocation7], 4
          %s322 = int_to_ptr.vmem [resolvable:$true] %s321
          %327 = dma.hbm_to_vmem [thread:$0]  %s320, 2048, %s322, [#allocation6], 128, 128, 8
        $region16: #{cross_attention.1} parent=11 // pred_fallthru
          _
        // Predicated region
        $region17: #{cross_attention.1} parent=11 // pred_check
          %p328 = pneg %p147
        $region18: #{cross_attention.1} parent=11 // pred_check_branch
          %330 = sbr.rel (%p328) target = $region20
        $region19: #{cross_attention.1} parent=11 // pred_region
          _
        $region20: #{cross_attention.1} parent=11 // pred_fallthru
          _
        // Predicated region
        $region21: #{cross_attention.1} parent=11 // pred_check
          %p331 = pneg %p168
        $region22: #{cross_attention.1} parent=11 // pred_check_branch
          %333 = sbr.rel (%p331) target = $region24
        $region23: #{cross_attention.1} parent=11 // pred_region
          %335 = vsyncadd [#allocation9], 0
          %s336 = sshll.u32 %s5, 4
          %s337 = int_to_ptr.hbm [resolvable:$true] %s336
          %s338 = sshll.u32 [#allocation8], 4
          %s339 = int_to_ptr.vmem [resolvable:$true] %s338
          %344 = dma.hbm_to_vmem [thread:$0]  %s337, 4096, %s339, [#allocation9], 256, 256, 16
        $region24: #{cross_attention.1} parent=11 // pred_fallthru
          _
        // Predicated region
        $region25: #{cross_attention.1} parent=11 // pred_check
          %p345 = pneg %p189
        $region26: #{cross_attention.1} parent=11 // pred_check_branch
          %347 = sbr.rel (%p345) target = $region28
        $region27: #{cross_attention.1} parent=11 // pred_region
          _
        $region28: #{cross_attention.1} parent=11 // pred_fallthru
          _
        // Predicated region
        $region29: #{cross_attention.1} parent=11 // pred_check
          %p348 = pneg %p210
        $region30: #{cross_attention.1} parent=11 // pred_check_branch
          %350 = sbr.rel (%p348) target = $region32
        $region31: #{cross_attention.1} parent=11 // pred_region
          %352 = vsyncadd [#allocation9], 0
          %s353 = sshll.u32 %s7, 4
          %s354 = int_to_ptr.hbm [resolvable:$true] %s353
          %s355 = sshll.u32 [#allocation10], 4
          %s356 = int_to_ptr.vmem [resolvable:$true] %s355
          %361 = dma.hbm_to_vmem [thread:$0]  %s354, 2048, %s356, [#allocation9], 128, 128, 8
        $region32: #{cross_attention.1} parent=11 // pred_fallthru
          _
        // Predicated region
        $region33: #{cross_attention.1} parent=11 // pred_check
          %p362 = pneg %p231
        $region34: #{cross_attention.1} parent=11 // pred_check_branch
          %364 = sbr.rel (%p362) target = $region36
        $region35: #{cross_attention.1} parent=11 // pred_region
          _
        $region36: #{cross_attention.1} parent=11 // pred_fallthru
          _
        // Predicated region
        $region37: #{cross_attention.1} parent=11 // pred_check
          %p365 = pneg %p252
        $region38: #{cross_attention.1} parent=11 // pred_check_branch
          %367 = sbr.rel (%p365) target = $region40
        $region39: #{cross_attention.1} parent=11 // pred_region
          _
        $region40: #{cross_attention.1} parent=11 // pred_fallthru
          _
        // Predicated region
        $region41: #{cross_attention.1} parent=11 // pred_check
          %p368 = pneg %p273
        $region42: #{cross_attention.1} parent=11 // pred_check_branch
          %370 = sbr.rel (%p368) target = $region44
        $region43: #{cross_attention.1} parent=11 // pred_region
          _
        $region44: #{cross_attention.1} parent=11 // pred_fallthru
          _
      $region12: #{cross_attention.1} parent=5 // pred_fallthru
        _
      %p371 = scmp.lt.s32.totalorder %s27, 2
      // Predicated region
      $region45: #{cross_attention.1} parent=5 // pred_check
        %p372 = pneg %p371
      $region46: #{cross_attention.1} parent=5 // pred_check_branch
        %374 = sbr.rel (%p372) target = $region48
      $region47: #{cross_attention.1} parent=5 // pred_region
        // Predicated region
        $region49: #{cross_attention.1} parent=47 // pred_check
          %p375 = pneg %p47
        $region50: #{cross_attention.1} parent=47 // pred_check_branch
          %377 = sbr.rel (%p375) target = $region52
        $region51: #{cross_attention.1} parent=47 // pred_region
          %s378 = sand.u32 %s37, 1
          %s379 = scalar_lea.sflag [#allocation3], %s378
          %s380 = sand.u32 %s37, 1
          %s381 = smul.addr %s380, 32
          %s382 = scalar_lea.vmem [#allocation2], %s381
          %s383 = smul.u32 4, %s27
          %385 = vsyncadd %s379, 0
          %s386 = smul.addr %s383, 8
          %s387 = scalar_lea.hbm %s0, %s386
          %s388 = sshll.u32 %s387, 4
          %s389 = int_to_ptr.hbm [resolvable:$true] %s388
          %s390 = sshll.u32 %s382, 4
          %s391 = int_to_ptr.vmem [resolvable:$true] %s390
          %396 = dma.hbm_to_vmem [thread:$0]  %s389, 512, %s391, %s379, 128, 128, 8
        $region52: #{cross_attention.1} parent=47 // pred_fallthru
          _
        // Predicated region
        $region53: #{cross_attention.1} parent=47 // pred_check
          %p397 = pneg %p73
        $region54: #{cross_attention.1} parent=47 // pred_check_branch
          %399 = sbr.rel (%p397) target = $region56
        $region55: #{cross_attention.1} parent=47 // pred_region
          %s400 = sand.u32 %s27, 1
          %s401 = scalar_lea.sflag [#allocation6], %s400
          %s402 = sand.u32 %s63, 1
          %s403 = smul.addr %s402, 64
          %s404 = scalar_lea.vmem [#allocation5], %s403
          %s405 = smul.u32 4, %s27
          %407 = vsyncadd %s401, 0
          %s408 = smul.addr %s405, 2
          %s409 = smul.addr %s408, 8
          %s410 = scalar_lea.hbm %s1, %s409
          %s411 = sshll.u32 %s410, 4
          %s412 = int_to_ptr.hbm [resolvable:$true] %s411
          %s413 = sshll.u32 %s404, 4
          %s414 = int_to_ptr.vmem [resolvable:$true] %s413
          %419 = dma.hbm_to_vmem [thread:$0]  %s412, 1024, %s414, %s401, 128, 128, 8
        $region56: #{cross_attention.1} parent=47 // pred_fallthru
          _
        // Predicated region
        $region57: #{cross_attention.1} parent=47 // pred_check
          %p420 = pneg %p99
        $region58: #{cross_attention.1} parent=47 // pred_check_branch
          %422 = sbr.rel (%p420) target = $region60
        $region59: #{cross_attention.1} parent=47 // pred_region
          %s423 = smul.u32 4, %s27
          %p424 = scmp.lt.s32.totalorder %s423, 7
          %s425 = scalar_select %p424, %s423, 7
          %s426 = scalar_lea.vmem %s2, %s425
          %s427 = smul.u32 4, %s27
        $region60: #{cross_attention.1} parent=47 // pred_fallthru
          _
      $region48: #{cross_attention.1} parent=5 // pred_fallthru
        _
      %p428 = scmp.le.s32.totalorder 1, %s27
      %p429 = scmp.lt.s32.totalorder %s27, 3
      %p430 = pnand %p428, %p429
      %p431 = pneg %p430
      // Predicated region
      $region61: #{cross_attention.1} parent=5 // pred_check
        _
      $region62: #{cross_attention.1} parent=5 // pred_check_branch
        %433 = sbr.rel (%p430) target = $region64
      $region63: #{cross_attention.1} parent=5 // pred_region
        %s434 = ssub.s32 %s27, 1
        %s435 = sand.u32 %s40, 1
        %s436 = scalar_lea.sflag [#allocation3], %s435
        %s437 = sand.u32 %s40, 1
        %s438 = smul.addr %s437, 32
        %s439 = scalar_lea.vmem [#allocation2], %s438
        // Predicated region
        $region65: #{cross_attention.1} parent=63 // pred_check
          %p440 = pneg %p53
        $region66: #{cross_attention.1} parent=63 // pred_check_branch
          %442 = sbr.rel (%p440) target = $region68
        $region67: #{cross_attention.1} parent=63 // pred_region
          %444 = dma.done %s436, 512
        $region68: #{cross_attention.1} parent=63 // pred_fallthru
          _
        %s445 = sand.u32 %s32, 1
        %s446 = scalar_lea.sflag [#allocation6], %s445
        %s447 = sand.u32 %s66, 1
        %s448 = smul.addr %s447, 64
        %s449 = scalar_lea.vmem [#allocation5], %s448
        // Predicated region
        $region69: #{cross_attention.1} parent=63 // pred_check
          %p450 = pneg %p79
        $region70: #{cross_attention.1} parent=63 // pred_check_branch
          %452 = sbr.rel (%p450) target = $region72
        $region71: #{cross_attention.1} parent=63 // pred_region
          %454 = dma.done %s446, 1024
        $region72: #{cross_attention.1} parent=63 // pred_fallthru
          _
        // Predicated region
        $region73: #{cross_attention.1} parent=63 // pred_check
          %p455 = pneg %p126
        $region74: #{cross_attention.1} parent=63 // pred_check_branch
          %457 = sbr.rel (%p455) target = $region76
        $region75: #{cross_attention.1} parent=63 // pred_region
          %459 = dma.done [#allocation6], 2048
        $region76: #{cross_attention.1} parent=63 // pred_fallthru
          _
        // Predicated region
        $region77: #{cross_attention.1} parent=63 // pred_check
          %p460 = pneg %p168
        $region78: #{cross_attention.1} parent=63 // pred_check_branch
          %462 = sbr.rel (%p460) target = $region80
        $region79: #{cross_attention.1} parent=63 // pred_region
          %464 = dma.done [#allocation9], 4096
        $region80: #{cross_attention.1} parent=63 // pred_fallthru
          _
        // Predicated region
        $region81: #{cross_attention.1} parent=63 // pred_check
          %p465 = pneg %p210
        $region82: #{cross_attention.1} parent=63 // pred_check_branch
          %467 = sbr.rel (%p465) target = $region84
        $region83: #{cross_attention.1} parent=63 // pred_region
          %469 = dma.done [#allocation9], 2048
        $region84: #{cross_attention.1} parent=63 // pred_fallthru
          _
        %s470 = sand.u32 %s40, 1
        %s471 = scalar_lea.sflag [#allocation3], %s470
        %s472 = sand.u32 %s40, 1
        %s473 = smul.addr %s472, 32
        %s474 = scalar_lea.vmem [#allocation2], %s473
        %p475 = pneg %p53
        %p476 = pneg %p50
        %s477 = sand.u32 %s32, 1
        %s478 = scalar_lea.sflag [#allocation6], %s477
        %s479 = sand.u32 %s66, 1
        %s480 = smul.addr %s479, 64
        %s481 = scalar_lea.vmem [#allocation5], %s480
        %p482 = pneg %p79
        %p483 = pneg %p76
        %s484 = smul.u32 4, %s32
        %p485 = scmp.lt.s32.totalorder %s484, 7
        %s486 = scalar_select %p485, %s484, 7
        %s487 = scalar_lea.vmem %s2, %s486
        %p488 = pneg %p105
        %p489 = pneg %p102
        %p490 = pneg %p126
        %p491 = pneg %p123
        %p492 = pneg %p147
        %p493 = pneg %p144
        %p494 = pneg %p168
        %p495 = pneg %p165
        %p496 = pneg %p189
        %p497 = pneg %p186
        %p498 = pneg %p210
        %p499 = pneg %p207
        %p500 = pneg %p231
        %p501 = pneg %p228
        %p502 = pneg %p252
        %p503 = pneg %p249
        %p504 = pneg %p273
        %p505 = pneg %p270
        %p506 = pneg %p299
        %p507 = pneg %p296
        %s508 = sand.u32 %s286, 1
        %s509 = scalar_lea.sflag [#allocation4], %s508
        %s510 = sand.u32 %s286, 1
        %s511 = smul.addr %s510, 32
        %s512 = scalar_lea.vmem [#allocation11], %s511
        %s513 = smul.u32 4, %s32
        %s514 = smul.u32 4, %s32
        %s515 = smul.u32 4, %s32
        %p516 = scmp.lt.s32.totalorder %s515, 7
        %s517 = scalar_select %p516, %s515, 7
        %s518 = scalar_lea.vmem %s2, %s517
        %s519 = smul.u32 4, %s32
        %s520 = smul.u32 4, %s32
        %v521 = vld [vmem:[%s439] sm:$0xff]
        %v522 = vld [vmem:[%s439 + $0x8] sm:$0xff]
        %v523 = vld [vmem:[%s439 + $0x10] sm:$0xff]
        %v524 = vld [vmem:[%s439 + $0x18] sm:$0xff]
        %v525 = vld [vmem:[%s449] sm:$0xff]
        %v526 = vld [vmem:[%s449 + $0x8] sm:$0xff]
        %v527 = vld [vmem:[%s449 + $0x10] sm:$0xff]
        %v528 = vld [vmem:[%s449 + $0x18] sm:$0xff]
        %v529 = vld [vmem:[%s449 + $0x20] sm:$0xff]
        %v530 = vld [vmem:[%s449 + $0x28] sm:$0xff]
        %v531 = vld [vmem:[%s449 + $0x30] sm:$0xff]
        %v532 = vld [vmem:[%s449 + $0x38] sm:$0xff]
        %v533 = vld [vmem:[%s518] sm:$0x1]
        %v534 = vld [vmem:[%s518 + $0x1] sm:$0x1]
        %v535 = vld [vmem:[%s518 + $0x2] sm:$0x1]
        %v536 = vld [vmem:[%s518 + $0x3] sm:$0x1]
        %v537 = vld [vmem:[#allocation7] sm:$0xff]
        %v538 = vld [vmem:[#allocation7 + $0x8] sm:$0xff]
        %v539 = vld [vmem:[#allocation7 + $0x10] sm:$0xff]
        %v540 = vld [vmem:[#allocation7 + $0x18] sm:$0xff]
        %v541 = vld [vmem:[#allocation7 + $0x20] sm:$0xff]
        %v542 = vld [vmem:[#allocation7 + $0x28] sm:$0xff]
        %v543 = vld [vmem:[#allocation7 + $0x30] sm:$0xff]
        %v544 = vld [vmem:[#allocation7 + $0x38] sm:$0xff]
        %v545 = vld [vmem:[#allocation7 + $0x40] sm:$0xff]
        %v546 = vld [vmem:[#allocation7 + $0x48] sm:$0xff]
        %v547 = vld [vmem:[#allocation7 + $0x50] sm:$0xff]
        %v548 = vld [vmem:[#allocation7 + $0x58] sm:$0xff]
        %v549 = vld [vmem:[#allocation7 + $0x60] sm:$0xff]
        %v550 = vld [vmem:[#allocation7 + $0x68] sm:$0xff]
        %v551 = vld [vmem:[#allocation7 + $0x70] sm:$0xff]
        %v552 = vld [vmem:[#allocation7 + $0x78] sm:$0xff]
        %v553 = vld [vmem:[%s4] sm:$0x1]
        %v555 = vperm.slane %v553, 0
        %557 = vmatpush.msra.mxu0 %v552
        %558 = vmatpush.msra.mxu0 %v551
        %559 = vmatpush.msra.mxu0 %v550
        %560 = vmatpush.msra.mxu0 %v549
        %561 = vmatpush.msra.mxu0 %v548
        %562 = vmatpush.msra.mxu0 %v547
        %563 = vmatpush.msra.mxu0 %v546
        %564 = vmatpush.msra.mxu0 %v545
        %565 = vmatpush.msra.mxu0 %v544
        %566 = vmatpush.msra.mxu0 %v543
        %567 = vmatpush.msra.mxu0 %v542
        %568 = vmatpush.msra.mxu0 %v541
        %569 = vmatpush.msra.mxu0 %v540
        %570 = vmatpush.msra.mxu0 %v539
        %571 = vmatpush.msra.mxu0 %v538
        %572 = vmatpush.msra.mxu0 %v537
        %573 = vmatmul.f32.gmra.mxu0 %v521
        %v574 = vpop.f32.mrf.mxu0
        %v575 = vadd.f32 %v555, %v574
        %576 = vmatmul.f32.gmra.mxu0 %v522
        %v577 = vpop.f32.mrf.mxu0
        %v578 = vadd.f32 %v555, %v577
        %579 = vmatmul.f32.gmra.mxu0 %v523
        %v580 = vpop.f32.mrf.mxu0
        %v581 = vadd.f32 %v555, %v580
        %582 = vmatmul.f32.gmra.mxu0 %v524
        %v583 = vpop.f32.mrf.mxu0
        %v584 = vadd.f32 %v555, %v583
        %585 = vdwg.mxu0
        %v586 = vld [vmem:[#allocation8] sm:$0xff]
        %v587 = vld [vmem:[#allocation8 + $0x8] sm:$0xff]
        %v588 = vld [vmem:[#allocation8 + $0x10] sm:$0xff]
        %v589 = vld [vmem:[#allocation8 + $0x18] sm:$0xff]
        %v590 = vld [vmem:[#allocation8 + $0x20] sm:$0xff]
        %v591 = vld [vmem:[#allocation8 + $0x28] sm:$0xff]
        %v592 = vld [vmem:[#allocation8 + $0x30] sm:$0xff]
        %v593 = vld [vmem:[#allocation8 + $0x38] sm:$0xff]
        %v594 = vld [vmem:[#allocation8 + $0x40] sm:$0xff]
        %v595 = vld [vmem:[#allocation8 + $0x48] sm:$0xff]
        %v596 = vld [vmem:[#allocation8 + $0x50] sm:$0xff]
        %v597 = vld [vmem:[#allocation8 + $0x58] sm:$0xff]
        %v598 = vld [vmem:[#allocation8 + $0x60] sm:$0xff]
        %v599 = vld [vmem:[#allocation8 + $0x68] sm:$0xff]
        %v600 = vld [vmem:[#allocation8 + $0x70] sm:$0xff]
        %v601 = vld [vmem:[#allocation8 + $0x78] sm:$0xff]
        %v602 = vld [vmem:[#allocation8 + $0x80] sm:$0xff]
        %v603 = vld [vmem:[#allocation8 + $0x88] sm:$0xff]
        %v604 = vld [vmem:[#allocation8 + $0x90] sm:$0xff]
        %v605 = vld [vmem:[#allocation8 + $0x98] sm:$0xff]
        %v606 = vld [vmem:[#allocation8 + $0xa0] sm:$0xff]
        %v607 = vld [vmem:[#allocation8 + $0xa8] sm:$0xff]
        %v608 = vld [vmem:[#allocation8 + $0xb0] sm:$0xff]
        %v609 = vld [vmem:[#allocation8 + $0xb8] sm:$0xff]
        %v610 = vld [vmem:[#allocation8 + $0xc0] sm:$0xff]
        %v611 = vld [vmem:[#allocation8 + $0xc8] sm:$0xff]
        %v612 = vld [vmem:[#allocation8 + $0xd0] sm:$0xff]
        %v613 = vld [vmem:[#allocation8 + $0xd8] sm:$0xff]
        %v614 = vld [vmem:[#allocation8 + $0xe0] sm:$0xff]
        %v615 = vld [vmem:[#allocation8 + $0xe8] sm:$0xff]
        %v616 = vld [vmem:[#allocation8 + $0xf0] sm:$0xff]
        %v617 = vld [vmem:[#allocation8 + $0xf8] sm:$0xff]
        %v618 = vld [vmem:[%s6] sm:$0x3]
        %v620 = vperm.slane %v618, 0
        %v621 = vperm.slane %v618, 1
        %624 = vmatpush.msra.mxu0 %v616
        %625 = vmatpush.msra.mxu0 %v614
        %626 = vmatpush.msra.mxu0 %v612
        %627 = vmatpush.msra.mxu0 %v610
        %628 = vmatpush.msra.mxu0 %v608
        %629 = vmatpush.msra.mxu0 %v606
        %630 = vmatpush.msra.mxu0 %v604
        %631 = vmatpush.msra.mxu0 %v602
        %632 = vmatpush.msra.mxu0 %v600
        %633 = vmatpush.msra.mxu0 %v598
        %634 = vmatpush.msra.mxu0 %v596
        %635 = vmatpush.msra.mxu0 %v594
        %636 = vmatpush.msra.mxu0 %v592
        %637 = vmatpush.msra.mxu0 %v590
        %638 = vmatpush.msra.mxu0 %v588
        %639 = vmatpush.msra.mxu0 %v586
        %640 = vmatmul.f32.gmra.mxu0 %v525
        %v641 = vpop.f32.mrf.mxu0
        %v642 = vadd.f32 %v620, %v641
        %643 = vmatmul.f32.gmra.mxu0 %v526
        %v644 = vpop.f32.mrf.mxu0
        %v645 = vadd.f32 %v620, %v644
        %646 = vmatmul.f32.gmra.mxu0 %v527
        %v647 = vpop.f32.mrf.mxu0
        %v648 = vadd.f32 %v620, %v647
        %649 = vmatmul.f32.gmra.mxu0 %v528
        %v650 = vpop.f32.mrf.mxu0
        %v651 = vadd.f32 %v620, %v650
        %652 = vmatmul.f32.gmra.mxu0 %v529
        %v653 = vpop.f32.mrf.mxu0
        %v654 = vadd.f32 %v620, %v653
        %655 = vmatmul.f32.gmra.mxu0 %v530
        %v656 = vpop.f32.mrf.mxu0
        %v657 = vadd.f32 %v620, %v656
        %658 = vmatmul.f32.gmra.mxu0 %v531
        %v659 = vpop.f32.mrf.mxu0
        %v660 = vadd.f32 %v620, %v659
        %661 = vmatmul.f32.gmra.mxu0 %v532
        %v662 = vpop.f32.mrf.mxu0
        %v663 = vadd.f32 %v620, %v662
        %664 = vdwg.mxu0
        %665 = vmatpush.msra.mxu0 %v617
        %666 = vmatpush.msra.mxu0 %v615
        %667 = vmatpush.msra.mxu0 %v613
        %668 = vmatpush.msra.mxu0 %v611
        %669 = vmatpush.msra.mxu0 %v609
        %670 = vmatpush.msra.mxu0 %v607
        %671 = vmatpush.msra.mxu0 %v605
        %672 = vmatpush.msra.mxu0 %v603
        %673 = vmatpush.msra.mxu0 %v601
        %674 = vmatpush.msra.mxu0 %v599
        %675 = vmatpush.msra.mxu0 %v597
        %676 = vmatpush.msra.mxu0 %v595
        %677 = vmatpush.msra.mxu0 %v593
        %678 = vmatpush.msra.mxu0 %v591
        %679 = vmatpush.msra.mxu0 %v589
        %680 = vmatpush.msra.mxu0 %v587
        %681 = vmatmul.f32.gmra.mxu0 %v525
        %v682 = vpop.f32.mrf.mxu0
        %v683 = vadd.f32 %v621, %v682
        %684 = vmatmul.f32.gmra.mxu0 %v526
        %v685 = vpop.f32.mrf.mxu0
        %v686 = vadd.f32 %v621, %v685
        %687 = vmatmul.f32.gmra.mxu0 %v527
        %v688 = vpop.f32.mrf.mxu0
        %v689 = vadd.f32 %v621, %v688
        %690 = vmatmul.f32.gmra.mxu0 %v528
        %v691 = vpop.f32.mrf.mxu0
        %v692 = vadd.f32 %v621, %v691
        %693 = vmatmul.f32.gmra.mxu0 %v529
        %v694 = vpop.f32.mrf.mxu0
        %v695 = vadd.f32 %v621, %v694
        %696 = vmatmul.f32.gmra.mxu0 %v530
        %v697 = vpop.f32.mrf.mxu0
        %v698 = vadd.f32 %v621, %v697
        %699 = vmatmul.f32.gmra.mxu0 %v531
        %v700 = vpop.f32.mrf.mxu0
        %v701 = vadd.f32 %v621, %v700
        %702 = vmatmul.f32.gmra.mxu0 %v532
        %v703 = vpop.f32.mrf.mxu0
        %v704 = vadd.f32 %v621, %v703
        %705 = vdwg.mxu0
        %v706 = vmul.f32 %v575, 0.17677669
        %v707 = vmul.f32 %v578, 0.17677669
        %v708 = vmul.f32 %v581, 0.17677669
        %v709 = vmul.f32 %v584, 0.17677669
        %v714 = vperm.slane %v533, 0
        %v715 = vperm.slane %v534, 0
        %v716 = vperm.slane %v535, 0
        %v717 = vperm.slane %v536, 0
        %vm722 = vcmask 261120
        %v724 = vsel %vm722, %v706, 0
        %v727 = vsel %vm722, %v642, 0
        %v730 = vsel %vm722, %v645, 0
        %732 = vmatpush.xpose.msra.mxu0 0.0
        %733 = vmatpush.xpose.msra.mxu0 0.0
        %734 = vmatpush.xpose.msra.mxu0 0.0
        %735 = vmatpush.xpose.msra.mxu0 0.0
        %736 = vmatpush.xpose.msra.mxu0 0.0
        %737 = vmatpush.xpose.msra.mxu0 0.0
        %738 = vmatpush.xpose.msra.mxu0 0.0
        %739 = vmatpush.xpose.msra.mxu0 0.0
        %740 = vmatpush.xpose.msra.mxu0 0.0
        %741 = vmatpush.xpose.msra.mxu0 0.0
        %742 = vmatpush.xpose.msra.mxu0 0.0
        %743 = vmatpush.xpose.msra.mxu0 0.0
        %744 = vmatpush.xpose.msra.mxu0 0.0
        %745 = vmatpush.xpose.msra.mxu0 0.0
        %746 = vmatpush.xpose.msra.mxu0 %v730
        %747 = vmatpush.xpose.msra.mxu0 %v727
        %748 = vmatmul.f32.gmra.mxu0 %v724
        %v749 = vpop.f32.mrf.mxu0
        %v750 = vadd.f32 %v714, %v749
        %751 = vdwg.mxu0
        %v753 = vsel %vm722, %v707, 0
        %v756 = vsel %vm722, %v648, 0
        %v759 = vsel %vm722, %v651, 0
        %761 = vmatpush.xpose.msra.mxu0 0.0
        %762 = vmatpush.xpose.msra.mxu0 0.0
        %763 = vmatpush.xpose.msra.mxu0 0.0
        %764 = vmatpush.xpose.msra.mxu0 0.0
        %765 = vmatpush.xpose.msra.mxu0 0.0
        %766 = vmatpush.xpose.msra.mxu0 0.0
        %767 = vmatpush.xpose.msra.mxu0 0.0
        %768 = vmatpush.xpose.msra.mxu0 0.0
        %769 = vmatpush.xpose.msra.mxu0 0.0
        %770 = vmatpush.xpose.msra.mxu0 0.0
        %771 = vmatpush.xpose.msra.mxu0 0.0
        %772 = vmatpush.xpose.msra.mxu0 0.0
        %773 = vmatpush.xpose.msra.mxu0 0.0
        %774 = vmatpush.xpose.msra.mxu0 0.0
        %775 = vmatpush.xpose.msra.mxu0 %v759
        %776 = vmatpush.xpose.msra.mxu0 %v756
        %777 = vmatmul.f32.gmra.mxu0 %v753
        %v778 = vpop.f32.mrf.mxu0
        %v779 = vadd.f32 %v715, %v778
        %780 = vdwg.mxu0
        %v782 = vsel %vm722, %v708, 0
        %v785 = vsel %vm722, %v654, 0
        %v788 = vsel %vm722, %v657, 0
        %790 = vmatpush.xpose.msra.mxu0 0.0
        %791 = vmatpush.xpose.msra.mxu0 0.0
        %792 = vmatpush.xpose.msra.mxu0 0.0
        %793 = vmatpush.xpose.msra.mxu0 0.0
        %794 = vmatpush.xpose.msra.mxu0 0.0
        %795 = vmatpush.xpose.msra.mxu0 0.0
        %796 = vmatpush.xpose.msra.mxu0 0.0
        %797 = vmatpush.xpose.msra.mxu0 0.0
        %798 = vmatpush.xpose.msra.mxu0 0.0
        %799 = vmatpush.xpose.msra.mxu0 0.0
        %800 = vmatpush.xpose.msra.mxu0 0.0
        %801 = vmatpush.xpose.msra.mxu0 0.0
        %802 = vmatpush.xpose.msra.mxu0 0.0
        %803 = vmatpush.xpose.msra.mxu0 0.0
        %804 = vmatpush.xpose.msra.mxu0 %v788
        %805 = vmatpush.xpose.msra.mxu0 %v785
        %806 = vmatmul.f32.gmra.mxu0 %v782
        %v807 = vpop.f32.mrf.mxu0
        %v808 = vadd.f32 %v716, %v807
        %809 = vdwg.mxu0
        %v811 = vsel %vm722, %v709, 0
        %v814 = vsel %vm722, %v660, 0
        %v817 = vsel %vm722, %v663, 0
        %819 = vmatpush.xpose.msra.mxu0 0.0
        %820 = vmatpush.xpose.msra.mxu0 0.0
        %821 = vmatpush.xpose.msra.mxu0 0.0
        %822 = vmatpush.xpose.msra.mxu0 0.0
        %823 = vmatpush.xpose.msra.mxu0 0.0
        %824 = vmatpush.xpose.msra.mxu0 0.0
        %825 = vmatpush.xpose.msra.mxu0 0.0
        %826 = vmatpush.xpose.msra.mxu0 0.0
        %827 = vmatpush.xpose.msra.mxu0 0.0
        %828 = vmatpush.xpose.msra.mxu0 0.0
        %829 = vmatpush.xpose.msra.mxu0 0.0
        %830 = vmatpush.xpose.msra.mxu0 0.0
        %831 = vmatpush.xpose.msra.mxu0 0.0
        %832 = vmatpush.xpose.msra.mxu0 0.0
        %833 = vmatpush.xpose.msra.mxu0 %v817
        %834 = vmatpush.xpose.msra.mxu0 %v814
        %835 = vmatmul.f32.gmra.mxu0 %v811
        %v836 = vpop.f32.mrf.mxu0
        %v837 = vadd.f32 %v717, %v836
        %838 = vdwg.mxu0
        %vm839 = vcmask 130048
        %v840 = vsel %vm839, %v750, -inf
        %841 = vmax.xlane.f32.xlu0 %v840
        %v842 = vpop.xlane.xlu0 %841
        %v843 = vsel %vm839, %v779, -inf
        %844 = vmax.xlane.f32.xlu0 %v843
        %v845 = vpop.xlane.xlu0 %844
        %v846 = vsel %vm839, %v808, -inf
        %847 = vmax.xlane.f32.xlu0 %v846
        %v848 = vpop.xlane.xlu0 %847
        %v849 = vsel %vm839, %v837, -inf
        %850 = vmax.xlane.f32.xlu0 %v849
        %v851 = vpop.xlane.xlu0 %850
        %v852 = vsub.f32 %v750, %v842
        %v853 = vsub.f32 %v779, %v845
        %v854 = vsub.f32 %v808, %v848
        %v855 = vsub.f32 %v837, %v851
        %v856 = vmul.f32 %v852, 1.442695
        %v857 = vpow.pop %v856
        %v858 = vmul.f32 %v853, 1.442695
        %v859 = vpow.pop %v858
        %v860 = vmul.f32 %v854, 1.442695
        %v861 = vpow.pop %v860
        %v862 = vmul.f32 %v855, 1.442695
        %v863 = vpow.pop %v862
        %v864 = vsel %vm839, %v857, 0.0
        %865 = vadd.xlane.f32.xlu0 %v864
        %v866 = vpop.xlane.xlu0 %865
        %v867 = vsel %vm839, %v859, 0.0
        %868 = vadd.xlane.f32.xlu0 %v867
        %v869 = vpop.xlane.xlu0 %868
        %v870 = vsel %vm839, %v861, 0.0
        %871 = vadd.xlane.f32.xlu0 %v870
        %v872 = vpop.xlane.xlu0 %871
        %v873 = vsel %vm839, %v863, 0.0
        %874 = vadd.xlane.f32.xlu0 %v873
        %v875 = vpop.xlane.xlu0 %874
        %v877 = vsel %vm839, %v857, 0
        %879 = vmatpush.msra.mxu0 0.0
        %880 = vmatpush.msra.mxu0 0.0
        %881 = vmatpush.msra.mxu0 0.0
        %882 = vmatpush.msra.mxu0 0.0
        %883 = vmatpush.msra.mxu0 0.0
        %884 = vmatpush.msra.mxu0 0.0
        %885 = vmatpush.msra.mxu0 0.0
        %886 = vmatpush.msra.mxu0 0.0
        %887 = vmatpush.msra.mxu0 0.0
        %888 = vmatpush.msra.mxu0 0.0
        %889 = vmatpush.msra.mxu0 0.0
        %890 = vmatpush.msra.mxu0 0.0
        %891 = vmatpush.msra.mxu0 0.0
        %892 = vmatpush.msra.mxu0 0.0
        %893 = vmatpush.msra.mxu0 %v686
        %894 = vmatpush.msra.mxu0 %v683
        %895 = vmatmul.f32.gmra.mxu0 %v877
        %v896 = vpop.f32.mrf.mxu0
        %v897 = vadd.f32 0.0, %v896
        %898 = vdwg.mxu0
        %v900 = vsel %vm839, %v859, 0
        %902 = vmatpush.msra.mxu0 0.0
        %903 = vmatpush.msra.mxu0 0.0
        %904 = vmatpush.msra.mxu0 0.0
        %905 = vmatpush.msra.mxu0 0.0
        %906 = vmatpush.msra.mxu0 0.0
        %907 = vmatpush.msra.mxu0 0.0
        %908 = vmatpush.msra.mxu0 0.0
        %909 = vmatpush.msra.mxu0 0.0
        %910 = vmatpush.msra.mxu0 0.0
        %911 = vmatpush.msra.mxu0 0.0
        %912 = vmatpush.msra.mxu0 0.0
        %913 = vmatpush.msra.mxu0 0.0
        %914 = vmatpush.msra.mxu0 0.0
        %915 = vmatpush.msra.mxu0 0.0
        %916 = vmatpush.msra.mxu0 %v692
        %917 = vmatpush.msra.mxu0 %v689
        %918 = vmatmul.f32.gmra.mxu0 %v900
        %v919 = vpop.f32.mrf.mxu0
        %v920 = vadd.f32 0.0, %v919
        %921 = vdwg.mxu0
        %v923 = vsel %vm839, %v861, 0
        %925 = vmatpush.msra.mxu0 0.0
        %926 = vmatpush.msra.mxu0 0.0
        %927 = vmatpush.msra.mxu0 0.0
        %928 = vmatpush.msra.mxu0 0.0
        %929 = vmatpush.msra.mxu0 0.0
        %930 = vmatpush.msra.mxu0 0.0
        %931 = vmatpush.msra.mxu0 0.0
        %932 = vmatpush.msra.mxu0 0.0
        %933 = vmatpush.msra.mxu0 0.0
        %934 = vmatpush.msra.mxu0 0.0
        %935 = vmatpush.msra.mxu0 0.0
        %936 = vmatpush.msra.mxu0 0.0
        %937 = vmatpush.msra.mxu0 0.0
        %938 = vmatpush.msra.mxu0 0.0
        %939 = vmatpush.msra.mxu0 %v698
        %940 = vmatpush.msra.mxu0 %v695
        %941 = vmatmul.f32.gmra.mxu0 %v923
        %v942 = vpop.f32.mrf.mxu0
        %v943 = vadd.f32 0.0, %v942
        %944 = vdwg.mxu0
        %v946 = vsel %vm839, %v863, 0
        %948 = vmatpush.msra.mxu0 0.0
        %949 = vmatpush.msra.mxu0 0.0
        %950 = vmatpush.msra.mxu0 0.0
        %951 = vmatpush.msra.mxu0 0.0
        %952 = vmatpush.msra.mxu0 0.0
        %953 = vmatpush.msra.mxu0 0.0
        %954 = vmatpush.msra.mxu0 0.0
        %955 = vmatpush.msra.mxu0 0.0
        %956 = vmatpush.msra.mxu0 0.0
        %957 = vmatpush.msra.mxu0 0.0
        %958 = vmatpush.msra.mxu0 0.0
        %959 = vmatpush.msra.mxu0 0.0
        %960 = vmatpush.msra.mxu0 0.0
        %961 = vmatpush.msra.mxu0 0.0
        %962 = vmatpush.msra.mxu0 %v704
        %963 = vmatpush.msra.mxu0 %v701
        %964 = vmatmul.f32.gmra.mxu0 %v946
        %v965 = vpop.f32.mrf.mxu0
        %v966 = vadd.f32 0.0, %v965
        %967 = vdwg.mxu0
        %v968 = vrcp.pop %v866
        %v969 = vmul.f32 %v866, %v968
        %v970 = vsub.f32 1.0, %v969
        %v971 = vmul.f32 %v968, %v970
        %v972 = vadd.f32 %v968, %v971
        %vm973 = vweird.f32 %v866
        %vm974 = vweird.f32 %v968
        %vm975 = vmor %vm973, %vm974
        %v976 = vsel %vm975, %v968, %v972
        %v977 = vand.u32 2147483647, %v866
        %vm978 = vcmp.eq.f32.partialorder %v977, 8.507059e+37
        %v979 = vand.u32 %v866, 2147483648
        %v980 = vor.u32 1.1754944e-38, %v979
        %v981 = vsel %vm978, %v980, %v976
        %v982 = vrcp.pop %v869
        %v983 = vmul.f32 %v869, %v982
        %v984 = vsub.f32 1.0, %v983
        %v985 = vmul.f32 %v982, %v984
        %v986 = vadd.f32 %v982, %v985
        %vm987 = vweird.f32 %v869
        %vm988 = vweird.f32 %v982
        %vm989 = vmor %vm987, %vm988
        %v990 = vsel %vm989, %v982, %v986
        %v991 = vand.u32 2147483647, %v869
        %vm992 = vcmp.eq.f32.partialorder %v991, 8.507059e+37
        %v993 = vand.u32 %v869, 2147483648
        %v994 = vor.u32 1.1754944e-38, %v993
        %v995 = vsel %vm992, %v994, %v990
        %v996 = vrcp.pop %v872
        %v997 = vmul.f32 %v872, %v996
        %v998 = vsub.f32 1.0, %v997
        %v999 = vmul.f32 %v996, %v998
        %v1000 = vadd.f32 %v996, %v999
        %vm1001 = vweird.f32 %v872
        %vm1002 = vweird.f32 %v996
        %vm1003 = vmor %vm1001, %vm1002
        %v1004 = vsel %vm1003, %v996, %v1000
        %v1005 = vand.u32 2147483647, %v872
        %vm1006 = vcmp.eq.f32.partialorder %v1005, 8.507059e+37
        %v1007 = vand.u32 %v872, 2147483648
        %v1008 = vor.u32 1.1754944e-38, %v1007
        %v1009 = vsel %vm1006, %v1008, %v1004
        %v1010 = vrcp.pop %v875
        %v1011 = vmul.f32 %v875, %v1010
        %v1012 = vsub.f32 1.0, %v1011
        %v1013 = vmul.f32 %v1010, %v1012
        %v1014 = vadd.f32 %v1010, %v1013
        %vm1015 = vweird.f32 %v875
        %vm1016 = vweird.f32 %v1010
        %vm1017 = vmor %vm1015, %vm1016
        %v1018 = vsel %vm1017, %v1010, %v1014
        %v1019 = vand.u32 2147483647, %v875
        %vm1020 = vcmp.eq.f32.partialorder %v1019, 8.507059e+37
        %v1021 = vand.u32 %v875, 2147483648
        %v1022 = vor.u32 1.1754944e-38, %v1021
        %v1023 = vsel %vm1020, %v1022, %v1018
        %v1024 = vmul.f32 %v897, %v981
        %v1025 = vmul.f32 %v920, %v995
        %v1026 = vmul.f32 %v943, %v1009
        %v1027 = vmul.f32 %v966, %v1023
        %v1028 = vld [vmem:[#allocation10] sm:$0xff]
        %v1029 = vld [vmem:[#allocation10 + $0x8] sm:$0xff]
        %v1030 = vld [vmem:[#allocation10 + $0x10] sm:$0xff]
        %v1031 = vld [vmem:[#allocation10 + $0x18] sm:$0xff]
        %1032 = vrot.lane.b32.xlu0 %v706, 96
        %v1033 = vpop.permute.xlu0 %1032
        %1034 = vrot.lane.b32.xlu0 %v642, 96
        %v1035 = vpop.permute.xlu0 %1034
        %1036 = vrot.lane.b32.xlu0 %v645, 96
        %v1037 = vpop.permute.xlu0 %1036
        %v1038 = vsel %vm722, %v1033, 0
        %v1040 = vsel %vm722, %v1035, 0
        %v1042 = vsel %vm722, %v1037, 0
        %1044 = vmatpush.xpose.msra.mxu0 0.0
        %1045 = vmatpush.xpose.msra.mxu0 0.0
        %1046 = vmatpush.xpose.msra.mxu0 0.0
        %1047 = vmatpush.xpose.msra.mxu0 0.0
        %1048 = vmatpush.xpose.msra.mxu0 0.0
        %1049 = vmatpush.xpose.msra.mxu0 0.0
        %1050 = vmatpush.xpose.msra.mxu0 0.0
        %1051 = vmatpush.xpose.msra.mxu0 0.0
        %1052 = vmatpush.xpose.msra.mxu0 0.0
        %1053 = vmatpush.xpose.msra.mxu0 0.0
        %1054 = vmatpush.xpose.msra.mxu0 0.0
        %1055 = vmatpush.xpose.msra.mxu0 0.0
        %1056 = vmatpush.xpose.msra.mxu0 0.0
        %1057 = vmatpush.xpose.msra.mxu0 0.0
        %1058 = vmatpush.xpose.msra.mxu0 %v1042
        %1059 = vmatpush.xpose.msra.mxu0 %v1040
        %1060 = vmatmul.f32.gmra.mxu0 %v1038
        %v1061 = vpop.f32.mrf.mxu0
        %v1062 = vadd.f32 %v714, %v1061
        %1063 = vdwg.mxu0
        %1064 = vrot.lane.b32.xlu0 %v707, 96
        %v1065 = vpop.permute.xlu0 %1064
        %1066 = vrot.lane.b32.xlu0 %v648, 96
        %v1067 = vpop.permute.xlu0 %1066
        %1068 = vrot.lane.b32.xlu0 %v651, 96
        %v1069 = vpop.permute.xlu0 %1068
        %v1070 = vsel %vm722, %v1065, 0
        %v1072 = vsel %vm722, %v1067, 0
        %v1074 = vsel %vm722, %v1069, 0
        %1076 = vmatpush.xpose.msra.mxu0 0.0
        %1077 = vmatpush.xpose.msra.mxu0 0.0
        %1078 = vmatpush.xpose.msra.mxu0 0.0
        %1079 = vmatpush.xpose.msra.mxu0 0.0
        %1080 = vmatpush.xpose.msra.mxu0 0.0
        %1081 = vmatpush.xpose.msra.mxu0 0.0
        %1082 = vmatpush.xpose.msra.mxu0 0.0
        %1083 = vmatpush.xpose.msra.mxu0 0.0
        %1084 = vmatpush.xpose.msra.mxu0 0.0
        %1085 = vmatpush.xpose.msra.mxu0 0.0
        %1086 = vmatpush.xpose.msra.mxu0 0.0
        %1087 = vmatpush.xpose.msra.mxu0 0.0
        %1088 = vmatpush.xpose.msra.mxu0 0.0
        %1089 = vmatpush.xpose.msra.mxu0 0.0
        %1090 = vmatpush.xpose.msra.mxu0 %v1074
        %1091 = vmatpush.xpose.msra.mxu0 %v1072
        %1092 = vmatmul.f32.gmra.mxu0 %v1070
        %v1093 = vpop.f32.mrf.mxu0
        %v1094 = vadd.f32 %v715, %v1093
        %1095 = vdwg.mxu0
        %1096 = vrot.lane.b32.xlu0 %v708, 96
        %v1097 = vpop.permute.xlu0 %1096
        %1098 = vrot.lane.b32.xlu0 %v654, 96
        %v1099 = vpop.permute.xlu0 %1098
        %1100 = vrot.lane.b32.xlu0 %v657, 96
        %v1101 = vpop.permute.xlu0 %1100
        %v1102 = vsel %vm722, %v1097, 0
        %v1104 = vsel %vm722, %v1099, 0
        %v1106 = vsel %vm722, %v1101, 0
        %1108 = vmatpush.xpose.msra.mxu0 0.0
        %1109 = vmatpush.xpose.msra.mxu0 0.0
        %1110 = vmatpush.xpose.msra.mxu0 0.0
        %1111 = vmatpush.xpose.msra.mxu0 0.0
        %1112 = vmatpush.xpose.msra.mxu0 0.0
        %1113 = vmatpush.xpose.msra.mxu0 0.0
        %1114 = vmatpush.xpose.msra.mxu0 0.0
        %1115 = vmatpush.xpose.msra.mxu0 0.0
        %1116 = vmatpush.xpose.msra.mxu0 0.0
        %1117 = vmatpush.xpose.msra.mxu0 0.0
        %1118 = vmatpush.xpose.msra.mxu0 0.0
        %1119 = vmatpush.xpose.msra.mxu0 0.0
        %1120 = vmatpush.xpose.msra.mxu0 0.0
        %1121 = vmatpush.xpose.msra.mxu0 0.0
        %1122 = vmatpush.xpose.msra.mxu0 %v1106
        %1123 = vmatpush.xpose.msra.mxu0 %v1104
        %1124 = vmatmul.f32.gmra.mxu0 %v1102
        %v1125 = vpop.f32.mrf.mxu0
        %v1126 = vadd.f32 %v716, %v1125
        %1127 = vdwg.mxu0
        %1128 = vrot.lane.b32.xlu0 %v709, 96
        %v1129 = vpop.permute.xlu0 %1128
        %1130 = vrot.lane.b32.xlu0 %v660, 96
        %v1131 = vpop.permute.xlu0 %1130
        %1132 = vrot.lane.b32.xlu0 %v663, 96
        %v1133 = vpop.permute.xlu0 %1132
        %v1134 = vsel %vm722, %v1129, 0
        %v1136 = vsel %vm722, %v1131, 0
        %v1138 = vsel %vm722, %v1133, 0
        %1140 = vmatpush.xpose.msra.mxu0 0.0
        %1141 = vmatpush.xpose.msra.mxu0 0.0
        %1142 = vmatpush.xpose.msra.mxu0 0.0
        %1143 = vmatpush.xpose.msra.mxu0 0.0
        %1144 = vmatpush.xpose.msra.mxu0 0.0
        %1145 = vmatpush.xpose.msra.mxu0 0.0
        %1146 = vmatpush.xpose.msra.mxu0 0.0
        %1147 = vmatpush.xpose.msra.mxu0 0.0
        %1148 = vmatpush.xpose.msra.mxu0 0.0
        %1149 = vmatpush.xpose.msra.mxu0 0.0
        %1150 = vmatpush.xpose.msra.mxu0 0.0
        %1151 = vmatpush.xpose.msra.mxu0 0.0
        %1152 = vmatpush.xpose.msra.mxu0 0.0
        %1153 = vmatpush.xpose.msra.mxu0 0.0
        %1154 = vmatpush.xpose.msra.mxu0 %v1138
        %1155 = vmatpush.xpose.msra.mxu0 %v1136
        %1156 = vmatmul.f32.gmra.mxu0 %v1134
        %v1157 = vpop.f32.mrf.mxu0
        %v1158 = vadd.f32 %v717, %v1157
        %1159 = vdwg.mxu0
        %v1160 = vsel %vm839, %v1062, -inf
        %1161 = vmax.xlane.f32.xlu0 %v1160
        %v1162 = vpop.xlane.xlu0 %1161
        %v1163 = vsel %vm839, %v1094, -inf
        %1164 = vmax.xlane.f32.xlu0 %v1163
        %v1165 = vpop.xlane.xlu0 %1164
        %v1166 = vsel %vm839, %v1126, -inf
        %1167 = vmax.xlane.f32.xlu0 %v1166
        %v1168 = vpop.xlane.xlu0 %1167
        %v1169 = vsel %vm839, %v1158, -inf
        %1170 = vmax.xlane.f32.xlu0 %v1169
        %v1171 = vpop.xlane.xlu0 %1170
        %v1172 = vsub.f32 %v1062, %v1162
        %v1173 = vsub.f32 %v1094, %v1165
        %v1174 = vsub.f32 %v1126, %v1168
        %v1175 = vsub.f32 %v1158, %v1171
        %v1176 = vmul.f32 %v1172, 1.442695
        %v1177 = vpow.pop %v1176
        %v1178 = vmul.f32 %v1173, 1.442695
        %v1179 = vpow.pop %v1178
        %v1180 = vmul.f32 %v1174, 1.442695
        %v1181 = vpow.pop %v1180
        %v1182 = vmul.f32 %v1175, 1.442695
        %v1183 = vpow.pop %v1182
        %v1184 = vsel %vm839, %v1177, 0.0
        %1185 = vadd.xlane.f32.xlu0 %v1184
        %v1186 = vpop.xlane.xlu0 %1185
        %v1187 = vsel %vm839, %v1179, 0.0
        %1188 = vadd.xlane.f32.xlu0 %v1187
        %v1189 = vpop.xlane.xlu0 %1188
        %v1190 = vsel %vm839, %v1181, 0.0
        %1191 = vadd.xlane.f32.xlu0 %v1190
        %v1192 = vpop.xlane.xlu0 %1191
        %v1193 = vsel %vm839, %v1183, 0.0
        %1194 = vadd.xlane.f32.xlu0 %v1193
        %v1195 = vpop.xlane.xlu0 %1194
        %1198 = vrot.lane.b32.xlu0 %v683, 96
        %v1199 = vpop.permute.xlu0 %1198
        %1200 = vrot.lane.b32.xlu0 %v686, 96
        %v1201 = vpop.permute.xlu0 %1200
        %v1205 = vsel %vm839, %v1177, 0
        %1207 = vmatpush.msra.mxu0 0.0
        %1208 = vmatpush.msra.mxu0 0.0
        %1209 = vmatpush.msra.mxu0 0.0
        %1210 = vmatpush.msra.mxu0 0.0
        %1211 = vmatpush.msra.mxu0 0.0
        %1212 = vmatpush.msra.mxu0 0.0
        %1213 = vmatpush.msra.mxu0 0.0
        %1214 = vmatpush.msra.mxu0 0.0
        %1215 = vmatpush.msra.mxu0 0.0
        %1216 = vmatpush.msra.mxu0 0.0
        %1217 = vmatpush.msra.mxu0 0.0
        %1218 = vmatpush.msra.mxu0 0.0
        %1219 = vmatpush.msra.mxu0 0.0
        %1220 = vmatpush.msra.mxu0 0.0
        %1221 = vmatpush.msra.mxu0 %v1201
        %1222 = vmatpush.msra.mxu0 %v1199
        %1223 = vmatmul.f32.gmra.mxu0 %v1205
        %v1224 = vpop.f32.mrf.mxu0
        %v1225 = vadd.f32 0.0, %v1224
        %1226 = vdwg.mxu0
        %1229 = vrot.lane.b32.xlu0 %v689, 96
        %v1230 = vpop.permute.xlu0 %1229
        %1231 = vrot.lane.b32.xlu0 %v692, 96
        %v1232 = vpop.permute.xlu0 %1231
        %v1236 = vsel %vm839, %v1179, 0
        %1238 = vmatpush.msra.mxu0 0.0
        %1239 = vmatpush.msra.mxu0 0.0
        %1240 = vmatpush.msra.mxu0 0.0
        %1241 = vmatpush.msra.mxu0 0.0
        %1242 = vmatpush.msra.mxu0 0.0
        %1243 = vmatpush.msra.mxu0 0.0
        %1244 = vmatpush.msra.mxu0 0.0
        %1245 = vmatpush.msra.mxu0 0.0
        %1246 = vmatpush.msra.mxu0 0.0
        %1247 = vmatpush.msra.mxu0 0.0
        %1248 = vmatpush.msra.mxu0 0.0
        %1249 = vmatpush.msra.mxu0 0.0
        %1250 = vmatpush.msra.mxu0 0.0
        %1251 = vmatpush.msra.mxu0 0.0
        %1252 = vmatpush.msra.mxu0 %v1232
        %1253 = vmatpush.msra.mxu0 %v1230
        %1254 = vmatmul.f32.gmra.mxu0 %v1236
        %v1255 = vpop.f32.mrf.mxu0
        %v1256 = vadd.f32 0.0, %v1255
        %1257 = vdwg.mxu0
        %1260 = vrot.lane.b32.xlu0 %v695, 96
        %v1261 = vpop.permute.xlu0 %1260
        %1262 = vrot.lane.b32.xlu0 %v698, 96
        %v1263 = vpop.permute.xlu0 %1262
        %v1267 = vsel %vm839, %v1181, 0
        %1269 = vmatpush.msra.mxu0 0.0
        %1270 = vmatpush.msra.mxu0 0.0
        %1271 = vmatpush.msra.mxu0 0.0
        %1272 = vmatpush.msra.mxu0 0.0
        %1273 = vmatpush.msra.mxu0 0.0
        %1274 = vmatpush.msra.mxu0 0.0
        %1275 = vmatpush.msra.mxu0 0.0
        %1276 = vmatpush.msra.mxu0 0.0
        %1277 = vmatpush.msra.mxu0 0.0
        %1278 = vmatpush.msra.mxu0 0.0
        %1279 = vmatpush.msra.mxu0 0.0
        %1280 = vmatpush.msra.mxu0 0.0
        %1281 = vmatpush.msra.mxu0 0.0
        %1282 = vmatpush.msra.mxu0 0.0
        %1283 = vmatpush.msra.mxu0 %v1263
        %1284 = vmatpush.msra.mxu0 %v1261
        %1285 = vmatmul.f32.gmra.mxu0 %v1267
        %v1286 = vpop.f32.mrf.mxu0
        %v1287 = vadd.f32 0.0, %v1286
        %1288 = vdwg.mxu0
        %1291 = vrot.lane.b32.xlu0 %v701, 96
        %v1292 = vpop.permute.xlu0 %1291
        %1293 = vrot.lane.b32.xlu0 %v704, 96
        %v1294 = vpop.permute.xlu0 %1293
        %v1298 = vsel %vm839, %v1183, 0
        %1300 = vmatpush.msra.mxu0 0.0
        %1301 = vmatpush.msra.mxu0 0.0
        %1302 = vmatpush.msra.mxu0 0.0
        %1303 = vmatpush.msra.mxu0 0.0
        %1304 = vmatpush.msra.mxu0 0.0
        %1305 = vmatpush.msra.mxu0 0.0
        %1306 = vmatpush.msra.mxu0 0.0
        %1307 = vmatpush.msra.mxu0 0.0
        %1308 = vmatpush.msra.mxu0 0.0
        %1309 = vmatpush.msra.mxu0 0.0
        %1310 = vmatpush.msra.mxu0 0.0
        %1311 = vmatpush.msra.mxu0 0.0
        %1312 = vmatpush.msra.mxu0 0.0
        %1313 = vmatpush.msra.mxu0 0.0
        %1314 = vmatpush.msra.mxu0 %v1294
        %1315 = vmatpush.msra.mxu0 %v1292
        %1316 = vmatmul.f32.gmra.mxu0 %v1298
        %v1317 = vpop.f32.mrf.mxu0
        %v1318 = vadd.f32 0.0, %v1317
        %1319 = vdwg.mxu0
        %v1320 = vrcp.pop %v1186
        %v1321 = vmul.f32 %v1186, %v1320
        %v1322 = vsub.f32 1.0, %v1321
        %v1323 = vmul.f32 %v1320, %v1322
        %v1324 = vadd.f32 %v1320, %v1323
        %vm1325 = vweird.f32 %v1186
        %vm1326 = vweird.f32 %v1320
        %vm1327 = vmor %vm1325, %vm1326
        %v1328 = vsel %vm1327, %v1320, %v1324
        %v1329 = vand.u32 2147483647, %v1186
        %vm1330 = vcmp.eq.f32.partialorder %v1329, 8.507059e+37
        %v1331 = vand.u32 %v1186, 2147483648
        %v1332 = vor.u32 1.1754944e-38, %v1331
        %v1333 = vsel %vm1330, %v1332, %v1328
        %v1334 = vrcp.pop %v1189
        %v1335 = vmul.f32 %v1189, %v1334
        %v1336 = vsub.f32 1.0, %v1335
        %v1337 = vmul.f32 %v1334, %v1336
        %v1338 = vadd.f32 %v1334, %v1337
        %vm1339 = vweird.f32 %v1189
        %vm1340 = vweird.f32 %v1334
        %vm1341 = vmor %vm1339, %vm1340
        %v1342 = vsel %vm1341, %v1334, %v1338
        %v1343 = vand.u32 2147483647, %v1189
        %vm1344 = vcmp.eq.f32.partialorder %v1343, 8.507059e+37
        %v1345 = vand.u32 %v1189, 2147483648
        %v1346 = vor.u32 1.1754944e-38, %v1345
        %v1347 = vsel %vm1344, %v1346, %v1342
        %v1348 = vrcp.pop %v1192
        %v1349 = vmul.f32 %v1192, %v1348
        %v1350 = vsub.f32 1.0, %v1349
        %v1351 = vmul.f32 %v1348, %v1350
        %v1352 = vadd.f32 %v1348, %v1351
        %vm1353 = vweird.f32 %v1192
        %vm1354 = vweird.f32 %v1348
        %vm1355 = vmor %vm1353, %vm1354
        %v1356 = vsel %vm1355, %v1348, %v1352
        %v1357 = vand.u32 2147483647, %v1192
        %vm1358 = vcmp.eq.f32.partialorder %v1357, 8.507059e+37
        %v1359 = vand.u32 %v1192, 2147483648
        %v1360 = vor.u32 1.1754944e-38, %v1359
        %v1361 = vsel %vm1358, %v1360, %v1356
        %v1362 = vrcp.pop %v1195
        %v1363 = vmul.f32 %v1195, %v1362
        %v1364 = vsub.f32 1.0, %v1363
        %v1365 = vmul.f32 %v1362, %v1364
        %v1366 = vadd.f32 %v1362, %v1365
        %vm1367 = vweird.f32 %v1195
        %vm1368 = vweird.f32 %v1362
        %vm1369 = vmor %vm1367, %vm1368
        %v1370 = vsel %vm1369, %v1362, %v1366
        %v1371 = vand.u32 2147483647, %v1195
        %vm1372 = vcmp.eq.f32.partialorder %v1371, 8.507059e+37
        %v1373 = vand.u32 %v1195, 2147483648
        %v1374 = vor.u32 1.1754944e-38, %v1373
        %v1375 = vsel %vm1372, %v1374, %v1370
        %v1376 = vmul.f32 %v1225, %v1333
        %v1377 = vmul.f32 %v1256, %v1347
        %v1378 = vmul.f32 %v1287, %v1361
        %v1379 = vmul.f32 %v1318, %v1375
        %v1380 = vld [vmem:[#allocation10 + $0x20] sm:$0xff]
        %v1381 = vld [vmem:[#allocation10 + $0x28] sm:$0xff]
        %v1382 = vld [vmem:[#allocation10 + $0x30] sm:$0xff]
        %v1383 = vld [vmem:[#allocation10 + $0x38] sm:$0xff]
        %v1385 = vsel %vm722, %v1376, 0
        %v1388 = vsel %vm722, %v1377, 0
        %v1391 = vsel %vm722, %v1378, 0
        %v1394 = vsel %vm722, %v1379, 0
        %1396 = vmatpush.msra.mxu0 0.0
        %1397 = vmatpush.msra.mxu0 0.0
        %1398 = vmatpush.msra.mxu0 0.0
        %1399 = vmatpush.msra.mxu0 0.0
        %1400 = vmatpush.msra.mxu0 0.0
        %1401 = vmatpush.msra.mxu0 0.0
        %1402 = vmatpush.msra.mxu0 0.0
        %1403 = vmatpush.msra.mxu0 0.0
        %1404 = vmatpush.msra.mxu0 0.0
        %1405 = vmatpush.msra.mxu0 0.0
        %1406 = vmatpush.msra.mxu0 0.0
        %1407 = vmatpush.msra.mxu0 0.0
        %1408 = vmatpush.msra.mxu0 %v1383
        %1409 = vmatpush.msra.mxu0 %v1382
        %1410 = vmatpush.msra.mxu0 %v1381
        %1411 = vmatpush.msra.mxu0 %v1380
        %1412 = vmatmul.f32.gmra.mxu0 %v1385
        %v1413 = vpop.f32.mrf.mxu0
        %v1414 = vadd.f32 0.0, %v1413
        %1415 = vmatmul.f32.gmra.mxu0 %v1388
        %v1416 = vpop.f32.mrf.mxu0
        %v1417 = vadd.f32 0.0, %v1416
        %1418 = vmatmul.f32.gmra.mxu0 %v1391
        %v1419 = vpop.f32.mrf.mxu0
        %v1420 = vadd.f32 0.0, %v1419
        %1421 = vmatmul.f32.gmra.mxu0 %v1394
        %v1422 = vpop.f32.mrf.mxu0
        %v1423 = vadd.f32 0.0, %v1422
        %1424 = vdwg.mxu0
        %v1426 = vsel %vm722, %v1024, 0
        %v1429 = vsel %vm722, %v1025, 0
        %v1432 = vsel %vm722, %v1026, 0
        %v1435 = vsel %vm722, %v1027, 0
        %1437 = vmatpush.msra.mxu0 0.0
        %1438 = vmatpush.msra.mxu0 0.0
        %1439 = vmatpush.msra.mxu0 0.0
        %1440 = vmatpush.msra.mxu0 0.0
        %1441 = vmatpush.msra.mxu0 0.0
        %1442 = vmatpush.msra.mxu0 0.0
        %1443 = vmatpush.msra.mxu0 0.0
        %1444 = vmatpush.msra.mxu0 0.0
        %1445 = vmatpush.msra.mxu0 0.0
        %1446 = vmatpush.msra.mxu0 0.0
        %1447 = vmatpush.msra.mxu0 0.0
        %1448 = vmatpush.msra.mxu0 0.0
        %1449 = vmatpush.msra.mxu0 %v1031
        %1450 = vmatpush.msra.mxu0 %v1030
        %1451 = vmatpush.msra.mxu0 %v1029
        %1452 = vmatpush.msra.mxu0 %v1028
        %1453 = vmatmul.f32.gmra.mxu0 %v1426
        %v1454 = vpop.f32.mrf.mxu0
        %v1455 = vadd.f32 %v1414, %v1454
        %1456 = vmatmul.f32.gmra.mxu0 %v1429
        %v1457 = vpop.f32.mrf.mxu0
        %v1458 = vadd.f32 %v1417, %v1457
        %1459 = vmatmul.f32.gmra.mxu0 %v1432
        %v1460 = vpop.f32.mrf.mxu0
        %v1461 = vadd.f32 %v1420, %v1460
        %1462 = vmatmul.f32.gmra.mxu0 %v1435
        %v1463 = vpop.f32.mrf.mxu0
        %v1464 = vadd.f32 %v1423, %v1463
        %1465 = vdwg.mxu0
        %1466 = vrot.lane.b32.xlu0 %v706, 64
        %v1467 = vpop.permute.xlu0 %1466
        %1468 = vrot.lane.b32.xlu0 %v642, 64
        %v1469 = vpop.permute.xlu0 %1468
        %1470 = vrot.lane.b32.xlu0 %v645, 64
        %v1471 = vpop.permute.xlu0 %1470
        %v1472 = vsel %vm722, %v1467, 0
        %v1474 = vsel %vm722, %v1469, 0
        %v1476 = vsel %vm722, %v1471, 0
        %1478 = vmatpush.xpose.msra.mxu0 0.0
        %1479 = vmatpush.xpose.msra.mxu0 0.0
        %1480 = vmatpush.xpose.msra.mxu0 0.0
        %1481 = vmatpush.xpose.msra.mxu0 0.0
        %1482 = vmatpush.xpose.msra.mxu0 0.0
        %1483 = vmatpush.xpose.msra.mxu0 0.0
        %1484 = vmatpush.xpose.msra.mxu0 0.0
        %1485 = vmatpush.xpose.msra.mxu0 0.0
        %1486 = vmatpush.xpose.msra.mxu0 0.0
        %1487 = vmatpush.xpose.msra.mxu0 0.0
        %1488 = vmatpush.xpose.msra.mxu0 0.0
        %1489 = vmatpush.xpose.msra.mxu0 0.0
        %1490 = vmatpush.xpose.msra.mxu0 0.0
        %1491 = vmatpush.xpose.msra.mxu0 0.0
        %1492 = vmatpush.xpose.msra.mxu0 %v1476
        %1493 = vmatpush.xpose.msra.mxu0 %v1474
        %1494 = vmatmul.f32.gmra.mxu0 %v1472
        %v1495 = vpop.f32.mrf.mxu0
        %v1496 = vadd.f32 %v714, %v1495
        %1497 = vdwg.mxu0
        %1498 = vrot.lane.b32.xlu0 %v707, 64
        %v1499 = vpop.permute.xlu0 %1498
        %1500 = vrot.lane.b32.xlu0 %v648, 64
        %v1501 = vpop.permute.xlu0 %1500
        %1502 = vrot.lane.b32.xlu0 %v651, 64
        %v1503 = vpop.permute.xlu0 %1502
        %v1504 = vsel %vm722, %v1499, 0
        %v1506 = vsel %vm722, %v1501, 0
        %v1508 = vsel %vm722, %v1503, 0
        %1510 = vmatpush.xpose.msra.mxu0 0.0
        %1511 = vmatpush.xpose.msra.mxu0 0.0
        %1512 = vmatpush.xpose.msra.mxu0 0.0
        %1513 = vmatpush.xpose.msra.mxu0 0.0
        %1514 = vmatpush.xpose.msra.mxu0 0.0
        %1515 = vmatpush.xpose.msra.mxu0 0.0
        %1516 = vmatpush.xpose.msra.mxu0 0.0
        %1517 = vmatpush.xpose.msra.mxu0 0.0
        %1518 = vmatpush.xpose.msra.mxu0 0.0
        %1519 = vmatpush.xpose.msra.mxu0 0.0
        %1520 = vmatpush.xpose.msra.mxu0 0.0
        %1521 = vmatpush.xpose.msra.mxu0 0.0
        %1522 = vmatpush.xpose.msra.mxu0 0.0
        %1523 = vmatpush.xpose.msra.mxu0 0.0
        %1524 = vmatpush.xpose.msra.mxu0 %v1508
        %1525 = vmatpush.xpose.msra.mxu0 %v1506
        %1526 = vmatmul.f32.gmra.mxu0 %v1504
        %v1527 = vpop.f32.mrf.mxu0
        %v1528 = vadd.f32 %v715, %v1527
        %1529 = vdwg.mxu0
        %1530 = vrot.lane.b32.xlu0 %v708, 64
        %v1531 = vpop.permute.xlu0 %1530
        %1532 = vrot.lane.b32.xlu0 %v654, 64
        %v1533 = vpop.permute.xlu0 %1532
        %1534 = vrot.lane.b32.xlu0 %v657, 64
        %v1535 = vpop.permute.xlu0 %1534
        %v1536 = vsel %vm722, %v1531, 0
        %v1538 = vsel %vm722, %v1533, 0
        %v1540 = vsel %vm722, %v1535, 0
        %1542 = vmatpush.xpose.msra.mxu0 0.0
        %1543 = vmatpush.xpose.msra.mxu0 0.0
        %1544 = vmatpush.xpose.msra.mxu0 0.0
        %1545 = vmatpush.xpose.msra.mxu0 0.0
        %1546 = vmatpush.xpose.msra.mxu0 0.0
        %1547 = vmatpush.xpose.msra.mxu0 0.0
        %1548 = vmatpush.xpose.msra.mxu0 0.0
        %1549 = vmatpush.xpose.msra.mxu0 0.0
        %1550 = vmatpush.xpose.msra.mxu0 0.0
        %1551 = vmatpush.xpose.msra.mxu0 0.0
        %1552 = vmatpush.xpose.msra.mxu0 0.0
        %1553 = vmatpush.xpose.msra.mxu0 0.0
        %1554 = vmatpush.xpose.msra.mxu0 0.0
        %1555 = vmatpush.xpose.msra.mxu0 0.0
        %1556 = vmatpush.xpose.msra.mxu0 %v1540
        %1557 = vmatpush.xpose.msra.mxu0 %v1538
        %1558 = vmatmul.f32.gmra.mxu0 %v1536
        %v1559 = vpop.f32.mrf.mxu0
        %v1560 = vadd.f32 %v716, %v1559
        %1561 = vdwg.mxu0
        %1562 = vrot.lane.b32.xlu0 %v709, 64
        %v1563 = vpop.permute.xlu0 %1562
        %1564 = vrot.lane.b32.xlu0 %v660, 64
        %v1565 = vpop.permute.xlu0 %1564
        %1566 = vrot.lane.b32.xlu0 %v663, 64
        %v1567 = vpop.permute.xlu0 %1566
        %v1568 = vsel %vm722, %v1563, 0
        %v1570 = vsel %vm722, %v1565, 0
        %v1572 = vsel %vm722, %v1567, 0
        %1574 = vmatpush.xpose.msra.mxu0 0.0
        %1575 = vmatpush.xpose.msra.mxu0 0.0
        %1576 = vmatpush.xpose.msra.mxu0 0.0
        %1577 = vmatpush.xpose.msra.mxu0 0.0
        %1578 = vmatpush.xpose.msra.mxu0 0.0
        %1579 = vmatpush.xpose.msra.mxu0 0.0
        %1580 = vmatpush.xpose.msra.mxu0 0.0
        %1581 = vmatpush.xpose.msra.mxu0 0.0
        %1582 = vmatpush.xpose.msra.mxu0 0.0
        %1583 = vmatpush.xpose.msra.mxu0 0.0
        %1584 = vmatpush.xpose.msra.mxu0 0.0
        %1585 = vmatpush.xpose.msra.mxu0 0.0
        %1586 = vmatpush.xpose.msra.mxu0 0.0
        %1587 = vmatpush.xpose.msra.mxu0 0.0
        %1588 = vmatpush.xpose.msra.mxu0 %v1572
        %1589 = vmatpush.xpose.msra.mxu0 %v1570
        %1590 = vmatmul.f32.gmra.mxu0 %v1568
        %v1591 = vpop.f32.mrf.mxu0
        %v1592 = vadd.f32 %v717, %v1591
        %1593 = vdwg.mxu0
        %v1594 = vsel %vm839, %v1496, -inf
        %1595 = vmax.xlane.f32.xlu0 %v1594
        %v1596 = vpop.xlane.xlu0 %1595
        %v1597 = vsel %vm839, %v1528, -inf
        %1598 = vmax.xlane.f32.xlu0 %v1597
        %v1599 = vpop.xlane.xlu0 %1598
        %v1600 = vsel %vm839, %v1560, -inf
        %1601 = vmax.xlane.f32.xlu0 %v1600
        %v1602 = vpop.xlane.xlu0 %1601
        %v1603 = vsel %vm839, %v1592, -inf
        %1604 = vmax.xlane.f32.xlu0 %v1603
        %v1605 = vpop.xlane.xlu0 %1604
        %v1606 = vsub.f32 %v1496, %v1596
        %v1607 = vsub.f32 %v1528, %v1599
        %v1608 = vsub.f32 %v1560, %v1602
        %v1609 = vsub.f32 %v1592, %v1605
        %v1610 = vmul.f32 %v1606, 1.442695
        %v1611 = vpow.pop %v1610
        %v1612 = vmul.f32 %v1607, 1.442695
        %v1613 = vpow.pop %v1612
        %v1614 = vmul.f32 %v1608, 1.442695
        %v1615 = vpow.pop %v1614
        %v1616 = vmul.f32 %v1609, 1.442695
        %v1617 = vpow.pop %v1616
        %v1618 = vsel %vm839, %v1611, 0.0
        %1619 = vadd.xlane.f32.xlu0 %v1618
        %v1620 = vpop.xlane.xlu0 %1619
        %v1621 = vsel %vm839, %v1613, 0.0
        %1622 = vadd.xlane.f32.xlu0 %v1621
        %v1623 = vpop.xlane.xlu0 %1622
        %v1624 = vsel %vm839, %v1615, 0.0
        %1625 = vadd.xlane.f32.xlu0 %v1624
        %v1626 = vpop.xlane.xlu0 %1625
        %v1627 = vsel %vm839, %v1617, 0.0
        %1628 = vadd.xlane.f32.xlu0 %v1627
        %v1629 = vpop.xlane.xlu0 %1628
        %1630 = vrot.lane.b32.xlu0 %v683, 64
        %v1631 = vpop.permute.xlu0 %1630
        %1632 = vrot.lane.b32.xlu0 %v686, 64
        %v1633 = vpop.permute.xlu0 %1632
        %v1637 = vsel %vm839, %v1611, 0
        %1639 = vmatpush.msra.mxu0 0.0
        %1640 = vmatpush.msra.mxu0 0.0
        %1641 = vmatpush.msra.mxu0 0.0
        %1642 = vmatpush.msra.mxu0 0.0
        %1643 = vmatpush.msra.mxu0 0.0
        %1644 = vmatpush.msra.mxu0 0.0
        %1645 = vmatpush.msra.mxu0 0.0
        %1646 = vmatpush.msra.mxu0 0.0
        %1647 = vmatpush.msra.mxu0 0.0
        %1648 = vmatpush.msra.mxu0 0.0
        %1649 = vmatpush.msra.mxu0 0.0
        %1650 = vmatpush.msra.mxu0 0.0
        %1651 = vmatpush.msra.mxu0 0.0
        %1652 = vmatpush.msra.mxu0 0.0
        %1653 = vmatpush.msra.mxu0 %v1633
        %1654 = vmatpush.msra.mxu0 %v1631
        %1655 = vmatmul.f32.gmra.mxu0 %v1637
        %v1656 = vpop.f32.mrf.mxu0
        %v1657 = vadd.f32 0.0, %v1656
        %1658 = vdwg.mxu0
        %1659 = vrot.lane.b32.xlu0 %v689, 64
        %v1660 = vpop.permute.xlu0 %1659
        %1661 = vrot.lane.b32.xlu0 %v692, 64
        %v1662 = vpop.permute.xlu0 %1661
        %v1666 = vsel %vm839, %v1613, 0
        %1668 = vmatpush.msra.mxu0 0.0
        %1669 = vmatpush.msra.mxu0 0.0
        %1670 = vmatpush.msra.mxu0 0.0
        %1671 = vmatpush.msra.mxu0 0.0
        %1672 = vmatpush.msra.mxu0 0.0
        %1673 = vmatpush.msra.mxu0 0.0
        %1674 = vmatpush.msra.mxu0 0.0
        %1675 = vmatpush.msra.mxu0 0.0
        %1676 = vmatpush.msra.mxu0 0.0
        %1677 = vmatpush.msra.mxu0 0.0
        %1678 = vmatpush.msra.mxu0 0.0
        %1679 = vmatpush.msra.mxu0 0.0
        %1680 = vmatpush.msra.mxu0 0.0
        %1681 = vmatpush.msra.mxu0 0.0
        %1682 = vmatpush.msra.mxu0 %v1662
        %1683 = vmatpush.msra.mxu0 %v1660
        %1684 = vmatmul.f32.gmra.mxu0 %v1666
        %v1685 = vpop.f32.mrf.mxu0
        %v1686 = vadd.f32 0.0, %v1685
        %1687 = vdwg.mxu0
        %1688 = vrot.lane.b32.xlu0 %v695, 64
        %v1689 = vpop.permute.xlu0 %1688
        %1690 = vrot.lane.b32.xlu0 %v698, 64
        %v1691 = vpop.permute.xlu0 %1690
        %v1695 = vsel %vm839, %v1615, 0
        %1697 = vmatpush.msra.mxu0 0.0
        %1698 = vmatpush.msra.mxu0 0.0
        %1699 = vmatpush.msra.mxu0 0.0
        %1700 = vmatpush.msra.mxu0 0.0
        %1701 = vmatpush.msra.mxu0 0.0
        %1702 = vmatpush.msra.mxu0 0.0
        %1703 = vmatpush.msra.mxu0 0.0
        %1704 = vmatpush.msra.mxu0 0.0
        %1705 = vmatpush.msra.mxu0 0.0
        %1706 = vmatpush.msra.mxu0 0.0
        %1707 = vmatpush.msra.mxu0 0.0
        %1708 = vmatpush.msra.mxu0 0.0
        %1709 = vmatpush.msra.mxu0 0.0
        %1710 = vmatpush.msra.mxu0 0.0
        %1711 = vmatpush.msra.mxu0 %v1691
        %1712 = vmatpush.msra.mxu0 %v1689
        %1713 = vmatmul.f32.gmra.mxu0 %v1695
        %v1714 = vpop.f32.mrf.mxu0
        %v1715 = vadd.f32 0.0, %v1714
        %1716 = vdwg.mxu0
        %1717 = vrot.lane.b32.xlu0 %v701, 64
        %v1718 = vpop.permute.xlu0 %1717
        %1719 = vrot.lane.b32.xlu0 %v704, 64
        %v1720 = vpop.permute.xlu0 %1719
        %v1724 = vsel %vm839, %v1617, 0
        %1726 = vmatpush.msra.mxu0 0.0
        %1727 = vmatpush.msra.mxu0 0.0
        %1728 = vmatpush.msra.mxu0 0.0
        %1729 = vmatpush.msra.mxu0 0.0
        %1730 = vmatpush.msra.mxu0 0.0
        %1731 = vmatpush.msra.mxu0 0.0
        %1732 = vmatpush.msra.mxu0 0.0
        %1733 = vmatpush.msra.mxu0 0.0
        %1734 = vmatpush.msra.mxu0 0.0
        %1735 = vmatpush.msra.mxu0 0.0
        %1736 = vmatpush.msra.mxu0 0.0
        %1737 = vmatpush.msra.mxu0 0.0
        %1738 = vmatpush.msra.mxu0 0.0
        %1739 = vmatpush.msra.mxu0 0.0
        %1740 = vmatpush.msra.mxu0 %v1720
        %1741 = vmatpush.msra.mxu0 %v1718
        %1742 = vmatmul.f32.gmra.mxu0 %v1724
        %v1743 = vpop.f32.mrf.mxu0
        %v1744 = vadd.f32 0.0, %v1743
        %1745 = vdwg.mxu0
        %v1746 = vrcp.pop %v1620
        %v1747 = vmul.f32 %v1620, %v1746
        %v1748 = vsub.f32 1.0, %v1747
        %v1749 = vmul.f32 %v1746, %v1748
        %v1750 = vadd.f32 %v1746, %v1749
        %vm1751 = vweird.f32 %v1620
        %vm1752 = vweird.f32 %v1746
        %vm1753 = vmor %vm1751, %vm1752
        %v1754 = vsel %vm1753, %v1746, %v1750
        %v1755 = vand.u32 2147483647, %v1620
        %vm1756 = vcmp.eq.f32.partialorder %v1755, 8.507059e+37
        %v1757 = vand.u32 %v1620, 2147483648
        %v1758 = vor.u32 1.1754944e-38, %v1757
        %v1759 = vsel %vm1756, %v1758, %v1754
        %v1760 = vrcp.pop %v1623
        %v1761 = vmul.f32 %v1623, %v1760
        %v1762 = vsub.f32 1.0, %v1761
        %v1763 = vmul.f32 %v1760, %v1762
        %v1764 = vadd.f32 %v1760, %v1763
        %vm1765 = vweird.f32 %v1623
        %vm1766 = vweird.f32 %v1760
        %vm1767 = vmor %vm1765, %vm1766
        %v1768 = vsel %vm1767, %v1760, %v1764
        %v1769 = vand.u32 2147483647, %v1623
        %vm1770 = vcmp.eq.f32.partialorder %v1769, 8.507059e+37
        %v1771 = vand.u32 %v1623, 2147483648
        %v1772 = vor.u32 1.1754944e-38, %v1771
        %v1773 = vsel %vm1770, %v1772, %v1768
        %v1774 = vrcp.pop %v1626
        %v1775 = vmul.f32 %v1626, %v1774
        %v1776 = vsub.f32 1.0, %v1775
        %v1777 = vmul.f32 %v1774, %v1776
        %v1778 = vadd.f32 %v1774, %v1777
        %vm1779 = vweird.f32 %v1626
        %vm1780 = vweird.f32 %v1774
        %vm1781 = vmor %vm1779, %vm1780
        %v1782 = vsel %vm1781, %v1774, %v1778
        %v1783 = vand.u32 2147483647, %v1626
        %vm1784 = vcmp.eq.f32.partialorder %v1783, 8.507059e+37
        %v1785 = vand.u32 %v1626, 2147483648
        %v1786 = vor.u32 1.1754944e-38, %v1785
        %v1787 = vsel %vm1784, %v1786, %v1782
        %v1788 = vrcp.pop %v1629
        %v1789 = vmul.f32 %v1629, %v1788
        %v1790 = vsub.f32 1.0, %v1789
        %v1791 = vmul.f32 %v1788, %v1790
        %v1792 = vadd.f32 %v1788, %v1791
        %vm1793 = vweird.f32 %v1629
        %vm1794 = vweird.f32 %v1788
        %vm1795 = vmor %vm1793, %vm1794
        %v1796 = vsel %vm1795, %v1788, %v1792
        %v1797 = vand.u32 2147483647, %v1629
        %vm1798 = vcmp.eq.f32.partialorder %v1797, 8.507059e+37
        %v1799 = vand.u32 %v1629, 2147483648
        %v1800 = vor.u32 1.1754944e-38, %v1799
        %v1801 = vsel %vm1798, %v1800, %v1796
        %v1802 = vmul.f32 %v1657, %v1759
        %v1803 = vmul.f32 %v1686, %v1773
        %v1804 = vmul.f32 %v1715, %v1787
        %v1805 = vmul.f32 %v1744, %v1801
        %v1806 = vld [vmem:[#allocation10 + $0x40] sm:$0xff]
        %v1807 = vld [vmem:[#allocation10 + $0x48] sm:$0xff]
        %v1808 = vld [vmem:[#allocation10 + $0x50] sm:$0xff]
        %v1809 = vld [vmem:[#allocation10 + $0x58] sm:$0xff]
        %v1811 = vsel %vm722, %v1802, 0
        %v1814 = vsel %vm722, %v1803, 0
        %v1817 = vsel %vm722, %v1804, 0
        %v1820 = vsel %vm722, %v1805, 0
        %1822 = vmatpush.msra.mxu0 0.0
        %1823 = vmatpush.msra.mxu0 0.0
        %1824 = vmatpush.msra.mxu0 0.0
        %1825 = vmatpush.msra.mxu0 0.0
        %1826 = vmatpush.msra.mxu0 0.0
        %1827 = vmatpush.msra.mxu0 0.0
        %1828 = vmatpush.msra.mxu0 0.0
        %1829 = vmatpush.msra.mxu0 0.0
        %1830 = vmatpush.msra.mxu0 0.0
        %1831 = vmatpush.msra.mxu0 0.0
        %1832 = vmatpush.msra.mxu0 0.0
        %1833 = vmatpush.msra.mxu0 0.0
        %1834 = vmatpush.msra.mxu0 %v1809
        %1835 = vmatpush.msra.mxu0 %v1808
        %1836 = vmatpush.msra.mxu0 %v1807
        %1837 = vmatpush.msra.mxu0 %v1806
        %1838 = vmatmul.f32.gmra.mxu0 %v1811
        %v1839 = vpop.f32.mrf.mxu0
        %v1840 = vadd.f32 0.0, %v1839
        %1841 = vmatmul.f32.gmra.mxu0 %v1814
        %v1842 = vpop.f32.mrf.mxu0
        %v1843 = vadd.f32 0.0, %v1842
        %1844 = vmatmul.f32.gmra.mxu0 %v1817
        %v1845 = vpop.f32.mrf.mxu0
        %v1846 = vadd.f32 0.0, %v1845
        %1847 = vmatmul.f32.gmra.mxu0 %v1820
        %v1848 = vpop.f32.mrf.mxu0
        %v1849 = vadd.f32 0.0, %v1848
        %1850 = vdwg.mxu0
        %v1851 = vadd.f32 %v1455, %v1840
        %v1852 = vadd.f32 %v1458, %v1843
        %v1853 = vadd.f32 %v1461, %v1846
        %v1854 = vadd.f32 %v1464, %v1849
        %1855 = vrot.lane.b32.xlu0 %v706, 32
        %v1856 = vpop.permute.xlu0 %1855
        %1857 = vrot.lane.b32.xlu0 %v642, 32
        %v1858 = vpop.permute.xlu0 %1857
        %1859 = vrot.lane.b32.xlu0 %v645, 32
        %v1860 = vpop.permute.xlu0 %1859
        %v1861 = vsel %vm722, %v1856, 0
        %v1863 = vsel %vm722, %v1858, 0
        %v1865 = vsel %vm722, %v1860, 0
        %1867 = vmatpush.xpose.msra.mxu0 0.0
        %1868 = vmatpush.xpose.msra.mxu0 0.0
        %1869 = vmatpush.xpose.msra.mxu0 0.0
        %1870 = vmatpush.xpose.msra.mxu0 0.0
        %1871 = vmatpush.xpose.msra.mxu0 0.0
        %1872 = vmatpush.xpose.msra.mxu0 0.0
        %1873 = vmatpush.xpose.msra.mxu0 0.0
        %1874 = vmatpush.xpose.msra.mxu0 0.0
        %1875 = vmatpush.xpose.msra.mxu0 0.0
        %1876 = vmatpush.xpose.msra.mxu0 0.0
        %1877 = vmatpush.xpose.msra.mxu0 0.0
        %1878 = vmatpush.xpose.msra.mxu0 0.0
        %1879 = vmatpush.xpose.msra.mxu0 0.0
        %1880 = vmatpush.xpose.msra.mxu0 0.0
        %1881 = vmatpush.xpose.msra.mxu0 %v1865
        %1882 = vmatpush.xpose.msra.mxu0 %v1863
        %1883 = vmatmul.f32.gmra.mxu0 %v1861
        %v1884 = vpop.f32.mrf.mxu0
        %v1885 = vadd.f32 %v714, %v1884
        %1886 = vdwg.mxu0
        %1887 = vrot.lane.b32.xlu0 %v707, 32
        %v1888 = vpop.permute.xlu0 %1887
        %1889 = vrot.lane.b32.xlu0 %v648, 32
        %v1890 = vpop.permute.xlu0 %1889
        %1891 = vrot.lane.b32.xlu0 %v651, 32
        %v1892 = vpop.permute.xlu0 %1891
        %v1893 = vsel %vm722, %v1888, 0
        %v1895 = vsel %vm722, %v1890, 0
        %v1897 = vsel %vm722, %v1892, 0
        %1899 = vmatpush.xpose.msra.mxu0 0.0
        %1900 = vmatpush.xpose.msra.mxu0 0.0
        %1901 = vmatpush.xpose.msra.mxu0 0.0
        %1902 = vmatpush.xpose.msra.mxu0 0.0
        %1903 = vmatpush.xpose.msra.mxu0 0.0
        %1904 = vmatpush.xpose.msra.mxu0 0.0
        %1905 = vmatpush.xpose.msra.mxu0 0.0
        %1906 = vmatpush.xpose.msra.mxu0 0.0
        %1907 = vmatpush.xpose.msra.mxu0 0.0
        %1908 = vmatpush.xpose.msra.mxu0 0.0
        %1909 = vmatpush.xpose.msra.mxu0 0.0
        %1910 = vmatpush.xpose.msra.mxu0 0.0
        %1911 = vmatpush.xpose.msra.mxu0 0.0
        %1912 = vmatpush.xpose.msra.mxu0 0.0
        %1913 = vmatpush.xpose.msra.mxu0 %v1897
        %1914 = vmatpush.xpose.msra.mxu0 %v1895
        %1915 = vmatmul.f32.gmra.mxu0 %v1893
        %v1916 = vpop.f32.mrf.mxu0
        %v1917 = vadd.f32 %v715, %v1916
        %1918 = vdwg.mxu0
        %1919 = vrot.lane.b32.xlu0 %v708, 32
        %v1920 = vpop.permute.xlu0 %1919
        %1921 = vrot.lane.b32.xlu0 %v654, 32
        %v1922 = vpop.permute.xlu0 %1921
        %1923 = vrot.lane.b32.xlu0 %v657, 32
        %v1924 = vpop.permute.xlu0 %1923
        %v1925 = vsel %vm722, %v1920, 0
        %v1927 = vsel %vm722, %v1922, 0
        %v1929 = vsel %vm722, %v1924, 0
        %1931 = vmatpush.xpose.msra.mxu0 0.0
        %1932 = vmatpush.xpose.msra.mxu0 0.0
        %1933 = vmatpush.xpose.msra.mxu0 0.0
        %1934 = vmatpush.xpose.msra.mxu0 0.0
        %1935 = vmatpush.xpose.msra.mxu0 0.0
        %1936 = vmatpush.xpose.msra.mxu0 0.0
        %1937 = vmatpush.xpose.msra.mxu0 0.0
        %1938 = vmatpush.xpose.msra.mxu0 0.0
        %1939 = vmatpush.xpose.msra.mxu0 0.0
        %1940 = vmatpush.xpose.msra.mxu0 0.0
        %1941 = vmatpush.xpose.msra.mxu0 0.0
        %1942 = vmatpush.xpose.msra.mxu0 0.0
        %1943 = vmatpush.xpose.msra.mxu0 0.0
        %1944 = vmatpush.xpose.msra.mxu0 0.0
        %1945 = vmatpush.xpose.msra.mxu0 %v1929
        %1946 = vmatpush.xpose.msra.mxu0 %v1927
        %1947 = vmatmul.f32.gmra.mxu0 %v1925
        %v1948 = vpop.f32.mrf.mxu0
        %v1949 = vadd.f32 %v716, %v1948
        %1950 = vdwg.mxu0
        %1951 = vrot.lane.b32.xlu0 %v709, 32
        %v1952 = vpop.permute.xlu0 %1951
        %1953 = vrot.lane.b32.xlu0 %v660, 32
        %v1954 = vpop.permute.xlu0 %1953
        %1955 = vrot.lane.b32.xlu0 %v663, 32
        %v1956 = vpop.permute.xlu0 %1955
        %v1957 = vsel %vm722, %v1952, 0
        %v1959 = vsel %vm722, %v1954, 0
        %v1961 = vsel %vm722, %v1956, 0
        %1963 = vmatpush.xpose.msra.mxu0 0.0
        %1964 = vmatpush.xpose.msra.mxu0 0.0
        %1965 = vmatpush.xpose.msra.mxu0 0.0
        %1966 = vmatpush.xpose.msra.mxu0 0.0
        %1967 = vmatpush.xpose.msra.mxu0 0.0
        %1968 = vmatpush.xpose.msra.mxu0 0.0
        %1969 = vmatpush.xpose.msra.mxu0 0.0
        %1970 = vmatpush.xpose.msra.mxu0 0.0
        %1971 = vmatpush.xpose.msra.mxu0 0.0
        %1972 = vmatpush.xpose.msra.mxu0 0.0
        %1973 = vmatpush.xpose.msra.mxu0 0.0
        %1974 = vmatpush.xpose.msra.mxu0 0.0
        %1975 = vmatpush.xpose.msra.mxu0 0.0
        %1976 = vmatpush.xpose.msra.mxu0 0.0
        %1977 = vmatpush.xpose.msra.mxu0 %v1961
        %1978 = vmatpush.xpose.msra.mxu0 %v1959
        %1979 = vmatmul.f32.gmra.mxu0 %v1957
        %v1980 = vpop.f32.mrf.mxu0
        %v1981 = vadd.f32 %v717, %v1980
        %1982 = vdwg.mxu0
        %v1983 = vsel %vm839, %v1885, -inf
        %1984 = vmax.xlane.f32.xlu0 %v1983
        %v1985 = vpop.xlane.xlu0 %1984
        %v1986 = vsel %vm839, %v1917, -inf
        %1987 = vmax.xlane.f32.xlu0 %v1986
        %v1988 = vpop.xlane.xlu0 %1987
        %v1989 = vsel %vm839, %v1949, -inf
        %1990 = vmax.xlane.f32.xlu0 %v1989
        %v1991 = vpop.xlane.xlu0 %1990
        %v1992 = vsel %vm839, %v1981, -inf
        %1993 = vmax.xlane.f32.xlu0 %v1992
        %v1994 = vpop.xlane.xlu0 %1993
        %v1995 = vsub.f32 %v1885, %v1985
        %v1996 = vsub.f32 %v1917, %v1988
        %v1997 = vsub.f32 %v1949, %v1991
        %v1998 = vsub.f32 %v1981, %v1994
        %v1999 = vmul.f32 %v1995, 1.442695
        %v2000 = vpow.pop %v1999
        %v2001 = vmul.f32 %v1996, 1.442695
        %v2002 = vpow.pop %v2001
        %v2003 = vmul.f32 %v1997, 1.442695
        %v2004 = vpow.pop %v2003
        %v2005 = vmul.f32 %v1998, 1.442695
        %v2006 = vpow.pop %v2005
        %v2007 = vsel %vm839, %v2000, 0.0
        %2008 = vadd.xlane.f32.xlu0 %v2007
        %v2009 = vpop.xlane.xlu0 %2008
        %v2010 = vsel %vm839, %v2002, 0.0
        %2011 = vadd.xlane.f32.xlu0 %v2010
        %v2012 = vpop.xlane.xlu0 %2011
        %v2013 = vsel %vm839, %v2004, 0.0
        %2014 = vadd.xlane.f32.xlu0 %v2013
        %v2015 = vpop.xlane.xlu0 %2014
        %v2016 = vsel %vm839, %v2006, 0.0
        %2017 = vadd.xlane.f32.xlu0 %v2016
        %v2018 = vpop.xlane.xlu0 %2017
        %2019 = vrot.lane.b32.xlu0 %v683, 32
        %v2020 = vpop.permute.xlu0 %2019
        %2021 = vrot.lane.b32.xlu0 %v686, 32
        %v2022 = vpop.permute.xlu0 %2021
        %v2026 = vsel %vm839, %v2000, 0
        %2028 = vmatpush.msra.mxu0 0.0
        %2029 = vmatpush.msra.mxu0 0.0
        %2030 = vmatpush.msra.mxu0 0.0
        %2031 = vmatpush.msra.mxu0 0.0
        %2032 = vmatpush.msra.mxu0 0.0
        %2033 = vmatpush.msra.mxu0 0.0
        %2034 = vmatpush.msra.mxu0 0.0
        %2035 = vmatpush.msra.mxu0 0.0
        %2036 = vmatpush.msra.mxu0 0.0
        %2037 = vmatpush.msra.mxu0 0.0
        %2038 = vmatpush.msra.mxu0 0.0
        %2039 = vmatpush.msra.mxu0 0.0
        %2040 = vmatpush.msra.mxu0 0.0
        %2041 = vmatpush.msra.mxu0 0.0
        %2042 = vmatpush.msra.mxu0 %v2022
        %2043 = vmatpush.msra.mxu0 %v2020
        %2044 = vmatmul.f32.gmra.mxu0 %v2026
        %v2045 = vpop.f32.mrf.mxu0
        %v2046 = vadd.f32 0.0, %v2045
        %2047 = vdwg.mxu0
        %2048 = vrot.lane.b32.xlu0 %v689, 32
        %v2049 = vpop.permute.xlu0 %2048
        %2050 = vrot.lane.b32.xlu0 %v692, 32
        %v2051 = vpop.permute.xlu0 %2050
        %v2055 = vsel %vm839, %v2002, 0
        %2057 = vmatpush.msra.mxu0 0.0
        %2058 = vmatpush.msra.mxu0 0.0
        %2059 = vmatpush.msra.mxu0 0.0
        %2060 = vmatpush.msra.mxu0 0.0
        %2061 = vmatpush.msra.mxu0 0.0
        %2062 = vmatpush.msra.mxu0 0.0
        %2063 = vmatpush.msra.mxu0 0.0
        %2064 = vmatpush.msra.mxu0 0.0
        %2065 = vmatpush.msra.mxu0 0.0
        %2066 = vmatpush.msra.mxu0 0.0
        %2067 = vmatpush.msra.mxu0 0.0
        %2068 = vmatpush.msra.mxu0 0.0
        %2069 = vmatpush.msra.mxu0 0.0
        %2070 = vmatpush.msra.mxu0 0.0
        %2071 = vmatpush.msra.mxu0 %v2051
        %2072 = vmatpush.msra.mxu0 %v2049
        %2073 = vmatmul.f32.gmra.mxu0 %v2055
        %v2074 = vpop.f32.mrf.mxu0
        %v2075 = vadd.f32 0.0, %v2074
        %2076 = vdwg.mxu0
        %2077 = vrot.lane.b32.xlu0 %v695, 32
        %v2078 = vpop.permute.xlu0 %2077
        %2079 = vrot.lane.b32.xlu0 %v698, 32
        %v2080 = vpop.permute.xlu0 %2079
        %v2084 = vsel %vm839, %v2004, 0
        %2086 = vmatpush.msra.mxu0 0.0
        %2087 = vmatpush.msra.mxu0 0.0
        %2088 = vmatpush.msra.mxu0 0.0
        %2089 = vmatpush.msra.mxu0 0.0
        %2090 = vmatpush.msra.mxu0 0.0
        %2091 = vmatpush.msra.mxu0 0.0
        %2092 = vmatpush.msra.mxu0 0.0
        %2093 = vmatpush.msra.mxu0 0.0
        %2094 = vmatpush.msra.mxu0 0.0
        %2095 = vmatpush.msra.mxu0 0.0
        %2096 = vmatpush.msra.mxu0 0.0
        %2097 = vmatpush.msra.mxu0 0.0
        %2098 = vmatpush.msra.mxu0 0.0
        %2099 = vmatpush.msra.mxu0 0.0
        %2100 = vmatpush.msra.mxu0 %v2080
        %2101 = vmatpush.msra.mxu0 %v2078
        %2102 = vmatmul.f32.gmra.mxu0 %v2084
        %v2103 = vpop.f32.mrf.mxu0
        %v2104 = vadd.f32 0.0, %v2103
        %2105 = vdwg.mxu0
        %2106 = vrot.lane.b32.xlu0 %v701, 32
        %v2107 = vpop.permute.xlu0 %2106
        %2108 = vrot.lane.b32.xlu0 %v704, 32
        %v2109 = vpop.permute.xlu0 %2108
        %v2113 = vsel %vm839, %v2006, 0
        %2115 = vmatpush.msra.mxu0 0.0
        %2116 = vmatpush.msra.mxu0 0.0
        %2117 = vmatpush.msra.mxu0 0.0
        %2118 = vmatpush.msra.mxu0 0.0
        %2119 = vmatpush.msra.mxu0 0.0
        %2120 = vmatpush.msra.mxu0 0.0
        %2121 = vmatpush.msra.mxu0 0.0
        %2122 = vmatpush.msra.mxu0 0.0
        %2123 = vmatpush.msra.mxu0 0.0
        %2124 = vmatpush.msra.mxu0 0.0
        %2125 = vmatpush.msra.mxu0 0.0
        %2126 = vmatpush.msra.mxu0 0.0
        %2127 = vmatpush.msra.mxu0 0.0
        %2128 = vmatpush.msra.mxu0 0.0
        %2129 = vmatpush.msra.mxu0 %v2109
        %2130 = vmatpush.msra.mxu0 %v2107
        %2131 = vmatmul.f32.gmra.mxu0 %v2113
        %v2132 = vpop.f32.mrf.mxu0
        %v2133 = vadd.f32 0.0, %v2132
        %2134 = vdwg.mxu0
        %v2135 = vrcp.pop %v2009
        %v2136 = vmul.f32 %v2009, %v2135
        %v2137 = vsub.f32 1.0, %v2136
        %v2138 = vmul.f32 %v2135, %v2137
        %v2139 = vadd.f32 %v2135, %v2138
        %vm2140 = vweird.f32 %v2009
        %vm2141 = vweird.f32 %v2135
        %vm2142 = vmor %vm2140, %vm2141
        %v2143 = vsel %vm2142, %v2135, %v2139
        %v2144 = vand.u32 2147483647, %v2009
        %vm2145 = vcmp.eq.f32.partialorder %v2144, 8.507059e+37
        %v2146 = vand.u32 %v2009, 2147483648
        %v2147 = vor.u32 1.1754944e-38, %v2146
        %v2148 = vsel %vm2145, %v2147, %v2143
        %v2149 = vrcp.pop %v2012
        %v2150 = vmul.f32 %v2012, %v2149
        %v2151 = vsub.f32 1.0, %v2150
        %v2152 = vmul.f32 %v2149, %v2151
        %v2153 = vadd.f32 %v2149, %v2152
        %vm2154 = vweird.f32 %v2012
        %vm2155 = vweird.f32 %v2149
        %vm2156 = vmor %vm2154, %vm2155
        %v2157 = vsel %vm2156, %v2149, %v2153
        %v2158 = vand.u32 2147483647, %v2012
        %vm2159 = vcmp.eq.f32.partialorder %v2158, 8.507059e+37
        %v2160 = vand.u32 %v2012, 2147483648
        %v2161 = vor.u32 1.1754944e-38, %v2160
        %v2162 = vsel %vm2159, %v2161, %v2157
        %v2163 = vrcp.pop %v2015
        %v2164 = vmul.f32 %v2015, %v2163
        %v2165 = vsub.f32 1.0, %v2164
        %v2166 = vmul.f32 %v2163, %v2165
        %v2167 = vadd.f32 %v2163, %v2166
        %vm2168 = vweird.f32 %v2015
        %vm2169 = vweird.f32 %v2163
        %vm2170 = vmor %vm2168, %vm2169
        %v2171 = vsel %vm2170, %v2163, %v2167
        %v2172 = vand.u32 2147483647, %v2015
        %vm2173 = vcmp.eq.f32.partialorder %v2172, 8.507059e+37
        %v2174 = vand.u32 %v2015, 2147483648
        %v2175 = vor.u32 1.1754944e-38, %v2174
        %v2176 = vsel %vm2173, %v2175, %v2171
        %v2177 = vrcp.pop %v2018
        %v2178 = vmul.f32 %v2018, %v2177
        %v2179 = vsub.f32 1.0, %v2178
        %v2180 = vmul.f32 %v2177, %v2179
        %v2181 = vadd.f32 %v2177, %v2180
        %vm2182 = vweird.f32 %v2018
        %vm2183 = vweird.f32 %v2177
        %vm2184 = vmor %vm2182, %vm2183
        %v2185 = vsel %vm2184, %v2177, %v2181
        %v2186 = vand.u32 2147483647, %v2018
        %vm2187 = vcmp.eq.f32.partialorder %v2186, 8.507059e+37
        %v2188 = vand.u32 %v2018, 2147483648
        %v2189 = vor.u32 1.1754944e-38, %v2188
        %v2190 = vsel %vm2187, %v2189, %v2185
        %v2191 = vmul.f32 %v2046, %v2148
        %v2192 = vmul.f32 %v2075, %v2162
        %v2193 = vmul.f32 %v2104, %v2176
        %v2194 = vmul.f32 %v2133, %v2190
        %v2195 = vld [vmem:[#allocation10 + $0x60] sm:$0xff]
        %v2196 = vld [vmem:[#allocation10 + $0x68] sm:$0xff]
        %v2197 = vld [vmem:[#allocation10 + $0x70] sm:$0xff]
        %v2198 = vld [vmem:[#allocation10 + $0x78] sm:$0xff]
        %v2200 = vsel %vm722, %v2191, 0
        %v2203 = vsel %vm722, %v2192, 0
        %v2206 = vsel %vm722, %v2193, 0
        %v2209 = vsel %vm722, %v2194, 0
        %2211 = vmatpush.msra.mxu0 0.0
        %2212 = vmatpush.msra.mxu0 0.0
        %2213 = vmatpush.msra.mxu0 0.0
        %2214 = vmatpush.msra.mxu0 0.0
        %2215 = vmatpush.msra.mxu0 0.0
        %2216 = vmatpush.msra.mxu0 0.0
        %2217 = vmatpush.msra.mxu0 0.0
        %2218 = vmatpush.msra.mxu0 0.0
        %2219 = vmatpush.msra.mxu0 0.0
        %2220 = vmatpush.msra.mxu0 0.0
        %2221 = vmatpush.msra.mxu0 0.0
        %2222 = vmatpush.msra.mxu0 0.0
        %2223 = vmatpush.msra.mxu0 %v2198
        %2224 = vmatpush.msra.mxu0 %v2197
        %2225 = vmatpush.msra.mxu0 %v2196
        %2226 = vmatpush.msra.mxu0 %v2195
        %2227 = vmatmul.f32.gmra.mxu0 %v2200
        %v2228 = vpop.f32.mrf.mxu0
        %v2229 = vadd.f32 0.0, %v2228
        %2230 = vmatmul.f32.gmra.mxu0 %v2203
        %v2231 = vpop.f32.mrf.mxu0
        %v2232 = vadd.f32 0.0, %v2231
        %2233 = vmatmul.f32.gmra.mxu0 %v2206
        %v2234 = vpop.f32.mrf.mxu0
        %v2235 = vadd.f32 0.0, %v2234
        %2236 = vmatmul.f32.gmra.mxu0 %v2209
        %v2237 = vpop.f32.mrf.mxu0
        %v2238 = vadd.f32 0.0, %v2237
        %2239 = vdwg.mxu0
        %v2240 = vadd.f32 %v1851, %v2229
        %v2241 = vadd.f32 %v1852, %v2232
        %v2242 = vadd.f32 %v1853, %v2235
        %v2243 = vadd.f32 %v1854, %v2238
        %v2244 = vld [vmem:[%s8] sm:$0x1]
        %v2246 = vperm.slane %v2244, 0
        %v2248 = vadd.f32 %v2240, %v2246
        %v2249 = vadd.f32 %v2241, %v2246
        %v2250 = vadd.f32 %v2242, %v2246
        %v2251 = vadd.f32 %v2243, %v2246
        %v2252 = vadd.f32 %v521, %v2248
        %v2253 = vadd.f32 %v522, %v2249
        %v2254 = vadd.f32 %v523, %v2250
        %v2255 = vadd.f32 %v524, %v2251
        %2256 = vadd.xlane.f32.xlu0 %v2252
        %v2257 = vpop.xlane.xlu0 %2256
        %2258 = vadd.xlane.f32.xlu0 %v2253
        %v2259 = vpop.xlane.xlu0 %2258
        %2260 = vadd.xlane.f32.xlu0 %v2254
        %v2261 = vpop.xlane.xlu0 %2260
        %2262 = vadd.xlane.f32.xlu0 %v2255
        %v2263 = vpop.xlane.xlu0 %2262
        %v2264 = vrcp.pop 128.0
        %v2265 = vmul.f32 128.0, %v2264
        %v2266 = vsub.f32 1.0, %v2265
        %v2267 = vmul.f32 %v2264, %v2266
        %v2268 = vadd.f32 %v2264, %v2267
        %vm2269 = vweird.f32 %v2264
        %v2270 = vsel %vm2269, %v2264, %v2268
        %v2271 = vmul.f32 %v2257, %v2270
        %v2272 = vmul.f32 %v2259, %v2270
        %v2273 = vmul.f32 %v2261, %v2270
        %v2274 = vmul.f32 %v2263, %v2270
        %v2275 = vsub.f32 %v2252, %v2271
        %v2276 = vsub.f32 %v2253, %v2272
        %v2277 = vsub.f32 %v2254, %v2273
        %v2278 = vsub.f32 %v2255, %v2274
        %v2279 = vmul.f32 %v2275, %v2275
        %v2280 = vmul.f32 %v2276, %v2276
        %v2281 = vmul.f32 %v2277, %v2277
        %v2282 = vmul.f32 %v2278, %v2278
        %2283 = vadd.xlane.f32.xlu0 %v2279
        %v2284 = vpop.xlane.xlu0 %2283
        %2285 = vadd.xlane.f32.xlu0 %v2280
        %v2286 = vpop.xlane.xlu0 %2285
        %2287 = vadd.xlane.f32.xlu0 %v2281
        %v2288 = vpop.xlane.xlu0 %2287
        %2289 = vadd.xlane.f32.xlu0 %v2282
        %v2290 = vpop.xlane.xlu0 %2289
        %v2291 = vmul.f32 %v2284, %v2270
        %v2292 = vmul.f32 %v2286, %v2270
        %v2293 = vmul.f32 %v2288, %v2270
        %v2294 = vmul.f32 %v2290, %v2270
        %v2295 = vadd.f32 %v2291, 1e-05
        %v2296 = vadd.f32 %v2292, 1e-05
        %v2297 = vadd.f32 %v2293, 1e-05
        %v2298 = vadd.f32 %v2294, 1e-05
        %v2299 = vrsqrt.pop %v2295
        %v2300 = vmul.f32 %v2299, %v2295
        %v2301 = vmul.f32 %v2300, %v2299
        %v2302 = vmul.f32 0.5, %v2301
        %v2303 = vsub.f32 1.5, %v2302
        %v2304 = vmul.f32 %v2299, %v2303
        %vm2305 = vweird.f32 %v2295
        %vm2306 = vweird.f32 %v2299
        %vm2307 = vmor %vm2305, %vm2306
        %v2308 = vsel %vm2307, %v2299, %v2304
        %v2309 = vrsqrt.pop %v2296
        %v2310 = vmul.f32 %v2309, %v2296
        %v2311 = vmul.f32 %v2310, %v2309
        %v2312 = vmul.f32 0.5, %v2311
        %v2313 = vsub.f32 1.5, %v2312
        %v2314 = vmul.f32 %v2309, %v2313
        %vm2315 = vweird.f32 %v2296
        %vm2316 = vweird.f32 %v2309
        %vm2317 = vmor %vm2315, %vm2316
        %v2318 = vsel %vm2317, %v2309, %v2314
        %v2319 = vrsqrt.pop %v2297
        %v2320 = vmul.f32 %v2319, %v2297
        %v2321 = vmul.f32 %v2320, %v2319
        %v2322 = vmul.f32 0.5, %v2321
        %v2323 = vsub.f32 1.5, %v2322
        %v2324 = vmul.f32 %v2319, %v2323
        %vm2325 = vweird.f32 %v2297
        %vm2326 = vweird.f32 %v2319
        %vm2327 = vmor %vm2325, %vm2326
        %v2328 = vsel %vm2327, %v2319, %v2324
        %v2329 = vrsqrt.pop %v2298
        %v2330 = vmul.f32 %v2329, %v2298
        %v2331 = vmul.f32 %v2330, %v2329
        %v2332 = vmul.f32 0.5, %v2331
        %v2333 = vsub.f32 1.5, %v2332
        %v2334 = vmul.f32 %v2329, %v2333
        %vm2335 = vweird.f32 %v2298
        %vm2336 = vweird.f32 %v2329
        %vm2337 = vmor %vm2335, %vm2336
        %v2338 = vsel %vm2337, %v2329, %v2334
        %v2339 = vmul.f32 %v2275, %v2308
        %v2340 = vmul.f32 %v2276, %v2318
        %v2341 = vmul.f32 %v2277, %v2328
        %v2342 = vmul.f32 %v2278, %v2338
        %v2343 = vld [vmem:[%s9] sm:$0x1]
        %v2345 = vperm.slane %v2343, 0
        %v2347 = vmul.f32 %v2339, %v2345
        %v2348 = vmul.f32 %v2340, %v2345
        %v2349 = vmul.f32 %v2341, %v2345
        %v2350 = vmul.f32 %v2342, %v2345
        %v2351 = vld [vmem:[%s10] sm:$0x1]
        %v2353 = vperm.slane %v2351, 0
        %v2355 = vadd.f32 %v2347, %v2353
        %v2356 = vadd.f32 %v2348, %v2353
        %v2357 = vadd.f32 %v2349, %v2353
        %v2358 = vadd.f32 %v2350, %v2353
        %2359 = vst [vmem:[%s512] sm:$0xff] %v2355
        %2360 = vst [vmem:[%s512 + $0x8] sm:$0xff] %v2356
        %2361 = vst [vmem:[%s512 + $0x10] sm:$0xff] %v2357
        %2362 = vst [vmem:[%s512 + $0x18] sm:$0xff] %v2358
        %s2363 = sand.u32 %s286, 1
        %s2364 = scalar_lea.sflag [#allocation4], %s2363
        %s2365 = sand.u32 %s286, 1
        %s2366 = smul.addr %s2365, 32
        %s2367 = scalar_lea.vmem [#allocation11], %s2366
        // Predicated region
        $region85: #{cross_attention.1} parent=63 // pred_check
          %p2368 = pneg %p296
        $region86: #{cross_attention.1} parent=63 // pred_check_branch
          %2370 = sbr.rel (%p2368) target = $region88
        $region87: #{cross_attention.1} parent=63 // pred_region
          %s2371 = smul.u32 4, %s32
          %2373 = vsyncadd %s2364, 0
          %s2374 = smul.addr %s2371, 8
          %s2375 = scalar_lea.hbm %s11, %s2374
          %s2376 = sshll.u32 %s2367, 4
          %s2377 = int_to_ptr.vmem [resolvable:$true] %s2376
          %s2378 = sshll.u32 %s2375, 4
          %s2379 = int_to_ptr.hbm [resolvable:$true] %s2378
          %2384 = dma.vmem_to_hbm [thread:$0]  %s2377, 512, %s2379, %s2364, 128, 128, 8
        $region88: #{cross_attention.1} parent=63 // pred_fallthru
          _
      $region64: #{cross_attention.1} parent=5 // pred_fallthru
        _
      %p2385 = scmp.le.s32.totalorder 2, %s27
      // Predicated region
      $region89: #{cross_attention.1} parent=5 // pred_check
        %p2386 = pneg %p2385
      $region90: #{cross_attention.1} parent=5 // pred_check_branch
        %2388 = sbr.rel (%p2386) target = $region92
      $region91: #{cross_attention.1} parent=5 // pred_region
        %s2389 = ssub.s32 %s27, 2
        // Predicated region
        $region93: #{cross_attention.1} parent=91 // pred_check
          %p2390 = pneg %p302
        $region94: #{cross_attention.1} parent=91 // pred_check_branch
          %2392 = sbr.rel (%p2390) target = $region96
        $region95: #{cross_attention.1} parent=91 // pred_region
          %s2393 = sand.u32 %s287, 1
          %s2394 = scalar_lea.sflag [#allocation4], %s2393
          %s2395 = sand.u32 %s287, 1
          %s2396 = smul.addr %s2395, 32
          %s2397 = scalar_lea.vmem [#allocation11], %s2396
          %2399 = dma.done %s2394, 512
        $region96: #{cross_attention.1} parent=91 // pred_fallthru
          _
      $region92: #{cross_attention.1} parent=5 // pred_fallthru
        _
    $region6: #{cross_attention.1} parent=1 // loop_footer
      %s31 = sadd.s32 1, %s27
    $region7: #{cross_attention.1} parent=1 // loop_footer_branch
      %26 = sbr.rel target = $region3
    $region8: #{cross_attention.1} parent=1 // loop_exit
      _
    %2400 = vsyncpa [#allocation3], 1
    %s2401 = scalar_lea.sflag [#allocation3], 1
    %2402 = vsyncpa %s2401, 1
    %2403 = vsyncpa [#allocation6], 1
    %s2404 = scalar_lea.sflag [#allocation6], 1
    %2405 = vsyncpa %s2404, 1
    %2406 = vsyncpa [#allocation9], 1
    %2407 = vsyncpa [#allocation4], 1
    %s2408 = scalar_lea.sflag [#allocation4], 1
    %2409 = vsyncpa %s2408, 1

</llo_original>
